<compile_context>
chip_gen: v7x
topology: tpu7x:2x2x1
jax: 0.10.0
libtpu: 0.0.40
codegen_flags: <defaults>
</compile_context>

<pallas_src>
import jax
import jax.numpy as jnp
from jax.experimental import pallas as pl
from jax.experimental.pallas import tpu as pltpu


def _round_up(x, m):
    return (x + m - 1) // m * m


def _vmem_budget_bytes():
    """Per-generation VMEM budget used both for strip sizing and vmem_limit."""
    try:
        kind = jax.devices()[0].device_kind.lower()
    except Exception:  # pragma: no cover - defensive
        kind = ""
    if "v7" in kind or "7x" in kind:
        return 48 * 1024 * 1024          # v7x: 64 MiB physical per TensorCore
    if "v5" in kind or "v6" in kind:
        return 96 * 1024 * 1024          # v5e / v6e: 128 MiB physical
    return 32 * 1024 * 1024              # conservative fallback


def _pick_strip_rows(Hp, W, C, C2, cd_bytes, budget):
    """Largest pooled-rows-per-strip Sp whose working set fits ~60% of budget."""
    W1, W2 = W - 2, W - 4
    Wp = W2 // 2
    W1p, W2p = _round_up(W1, 8), _round_up(W2, 8)

    def est(Sp):
        S_in, H1s, H2s = 2 * Sp + 4, 2 * Sp + 2, 2 * Sp
        b = 2 * S_in * W * C * cd_bytes            # x strip (double-buffered)
        b += H1s * W1p * 9 * C * cd_bytes          # conv1 im2col slab
        b += H1s * W1p * C2 * 4                    # conv1 f32 epilogue
        b += H1s * W1 * C2 * cd_bytes              # h1
        b += H2s * W2p * 9 * C2 * cd_bytes         # conv2 im2col slab
        b += H2s * W2p * C2 * 4                    # conv2 f32 epilogue
        b += 2 * Sp * Wp * C2 * 4                  # pooled strip (double-buffered)
        b += (9 * C + 9 * C2) * C2 * cd_bytes      # resident weights
        return b

    Sp = max(1, Hp)
    while Sp > 1 and est(Sp) > int(0.6 * budget):
        Sp = (Sp + 1) // 2
    return Sp


def _make_kernel(S_in, W, C, C2, Sp, compute_dtype):
    """Kernel for one (batch, strip) grid step; all shapes static."""
    H1s, W1 = S_in - 2, W - 2            # conv1 output extent in the strip
    H2s, W2 = H1s - 2, W1 - 2            # conv2 output extent (= 2*Sp rows)
    Wp = W2 // 2                         # pooled cols (floor)

    def _conv3x3_relu(t, w_ref, b_ref, Hc, Wc, out_dtype):
        # t: (Ht, Wt, Cin).  Build the (Hc, Wc, 9*Cin) patch slab with 3 lane
        # concats (kx taps) + 3 cheap leading-dim row-offset slices (ky taps);
        # flat K order is (ky, kx, c), matching the HWIO->(9*Cin, Cout) weights.
        cin = t.shape[-1]
        cols = jnp.concatenate([t[:, kx:kx + Wc, :] for kx in range(3)],
                               axis=-1)                    # (Ht, Wc, 3*Cin)
        slab = jnp.concatenate([cols[ky:ky + Hc] for ky in range(3)],
                               axis=-1)                    # (Hc, Wc, 9*Cin)
        # Pad W to a multiple of 8 sublanes so the flatten is an aligned merge.
        Wc8 = _round_up(Wc, 8)
        if Wc8 != Wc:
            pad = jnp.zeros((Hc, Wc8 - Wc, 9 * cin), slab.dtype)
            slab = jnp.concatenate([slab, pad], axis=1)
        acc = jnp.dot(slab.reshape(Hc * Wc8, 9 * cin), w_ref[...],
                      preferred_element_type=jnp.float32)  # (Hc*Wc8, C2) f32
        y = jnp.maximum(acc + b_ref[0], 0.0)               # fused bias + ReLU
        y = y.reshape(Hc, Wc8, -1)[:, :Wc, :]              # drop pad columns
        return y.astype(out_dtype)

    def kernel(x_ref, w1_ref, b1_ref, w2_ref, b2_ref, o_ref):
        # x_ref : (1, S_in, W, C)        w1_ref: (9C, 2C)   b1_ref: (1, 2C)
        # w2_ref: (9*2C, 2C)             b2_ref: (1, 2C)    o_ref : (1, Sp, Wp, 2C)
        x = x_ref[0]                                        # already compute_dtype
        h1 = _conv3x3_relu(x, w1_ref, b1_ref, H1s, W1, compute_dtype)
        h2 = _conv3x3_relu(h1, w2_ref, b2_ref, H2s, W2, jnp.float32)

        # maxpool 2x2 / stride 2 (floor): crop W to even extent, two pairwise
        # maxima on the VPU (row pairs via leading-dim split, col pairs next).
        h2c = h2[:, :2 * Wp, :]                             # (2*Sp, 2*Wp, C2)
        h2r = h2c.reshape(Sp, 2, 2 * Wp, C2)
        rmax = jnp.maximum(h2r[:, 0], h2r[:, 1])            # (Sp, 2*Wp, C2)
        pooled = jnp.max(rmax.reshape(Sp, Wp, 2, C2), axis=2)
        o_ref[0] = pooled.astype(o_ref.dtype)

    return kernel


def contracting_block_nhwc(x_nhwc, w1, b1, w2, b2, *,
                           compute_dtype=jnp.float32, max_strip_rows=None):
    """NHWC core.  x_nhwc: (N,H,W,C); w1:(2C,C,3,3), b1:(2C,), w2:(2C,2C,3,3), b2:(2C,).

    Returns (N, Hp, Wp, 2C) with Hp=(H-4)//2, Wp=(W-4)//2.
    compute_dtype: MXU operand dtype (bf16 recommended on v5e/v6e/v7x);
    accumulation, bias and ReLU are always f32.
    """
    N, H, W, C = x_nhwc.shape
    C2 = w1.shape[0]
    out_dtype = x_nhwc.dtype
    H2a, W2a = H - 4, W - 4
    Hp, Wp = H2a // 2, W2a // 2
    if Hp <= 0 or Wp <= 0:
        raise ValueError("input spatial dims too small for ContractingBlock")

    cd_bytes = jnp.dtype(compute_dtype).itemsize
    budget = _vmem_budget_bytes()
    Sp = _pick_strip_rows(Hp, W, C, C2, cd_bytes, budget)
    if max_strip_rows is not None:
        Sp = max(1, min(Sp, int(max_strip_rows)))
    n_strips = -(-Hp // Sp)
    S_in = 2 * Sp + 4

    # Cast once in the wrapper: halves x DMA bytes / VMEM footprint for bf16.
    x_cd = x_nhwc.astype(compute_dtype)
    H_pad = max(H, 2 * Sp * n_strips + 4)
    if H_pad > H:
        # Padded rows only ever feed pooled rows that are sliced away below.
        x_cd = jnp.pad(x_cd, ((0, 0), (0, H_pad - H), (0, 0), (0, 0)))

    # Overlapping row strips (4-row halo duplicated in HBM; see TODO in header).
    strips = jnp.stack(
        [x_cd[:, s * 2 * Sp: s * 2 * Sp + S_in] for s in range(n_strips)],
        axis=1)                                   # (N, n_strips, S_in, W, C)
    strips = strips.reshape(N * n_strips, S_in, W, C)
    NS = N * n_strips

    # OIHW -> HWIO -> (9*Cin, Cout): one K=9*Cin matmul per conv layer.
    w1_flat = jnp.transpose(w1, (2, 3, 1, 0)).reshape(9 * C, C2).astype(compute_dtype)
    w2_flat = jnp.transpose(w2, (2, 3, 1, 0)).reshape(9 * C2, C2).astype(compute_dtype)
    b1_2d = b1.reshape(1, C2).astype(jnp.float32)
    b2_2d = b2.reshape(1, C2).astype(jnp.float32)

    kernel = _make_kernel(S_in, W, C, C2, Sp, compute_dtype)

    flops = 2 * N * ((H - 2) * (W - 2) * 9 * C * C2 + H2a * W2a * 9 * C2 * C2)
    bytes_accessed = (strips.size * cd_bytes
                      + (w1_flat.size + w2_flat.size) * cd_bytes
                      + (b1_2d.size + b2_2d.size) * 4
                      + NS * Sp * Wp * C2 * jnp.dtype(out_dtype).itemsize)
    cost = pl.CostEstimate(flops=int(flops), transcendentals=0,
                           bytes_accessed=int(bytes_accessed))

    out_strips = pl.pallas_call(
        kernel,
        out_shape=jax.ShapeDtypeStruct((NS, Sp, Wp, C2), out_dtype),
        grid=(NS,),
        in_specs=[
            pl.BlockSpec((1, S_in, W, C), lambda i: (i, 0, 0, 0)),
            pl.BlockSpec((9 * C, C2), lambda i: (0, 0)),
            pl.BlockSpec((1, C2), lambda i: (0, 0)),
            pl.BlockSpec((9 * C2, C2), lambda i: (0, 0)),
            pl.BlockSpec((1, C2), lambda i: (0, 0)),
        ],
        out_specs=pl.BlockSpec((1, Sp, Wp, C2), lambda i: (i, 0, 0, 0)),
        compiler_params=pltpu.CompilerParams(
            # Flattened batch*strip axis: shards across megacore / v7x 2 TCs.
            dimension_semantics=("parallel",),
            vmem_limit_bytes=budget,
        ),
        cost_estimate=cost,
    )(strips, w1_flat, b1_2d, w2_flat, b2_2d)

    out = out_strips.reshape(N, n_strips * Sp, Wp, C2)[:, :Hp]
    return out


def contracting_block(x_nchw, w1, b1, w2, b2, *, compute_dtype=jnp.float32,
                      max_strip_rows=None):
    """NCHW interface matching the PyTorch module.

    # TODO(synk): keep the surrounding model NHWC and call
    # contracting_block_nhwc directly to avoid these two HBM transpose passes.
    """
    x_nhwc = jnp.transpose(x_nchw, (0, 2, 3, 1))              # NCHW -> NHWC
    out = contracting_block_nhwc(x_nhwc, w1, b1, w2, b2,
                                 compute_dtype=compute_dtype,
                                 max_strip_rows=max_strip_rows)
    return jnp.transpose(out, (0, 3, 1, 2))                   # NHWC -> NCHW


def _reference(x, w1, b1, w2, b2):
    dn = ("NCHW", "OIHW", "NCHW")
    prec = jax.lax.Precision.HIGHEST
    y = jax.lax.conv_general_dilated(x, w1, (1, 1), "VALID",
                                     dimension_numbers=dn, precision=prec)
    y = jax.nn.relu(y + b1[None, :, None, None])
    y = jax.lax.conv_general_dilated(y, w2, (1, 1), "VALID",
                                     dimension_numbers=dn, precision=prec)
    y = jax.nn.relu(y + b2[None, :, None, None])
    y = jax.lax.reduce_window(y, -jnp.inf, jax.lax.max,
                              (1, 1, 2, 2), (1, 1, 2, 2), "VALID")
    return y


if __name__ == "__main__":
    key = jax.random.PRNGKey(0)
    k_x, k_w1, k_b1, k_w2, k_b2 = jax.random.split(key, 5)

    N, C = 2, 4
    C2 = 2 * C

    # Deterministic, fan-in-scaled parameter init (shapes from nn.Conv2d).
    w1 = jax.random.normal(k_w1, (C2, C, 3, 3), jnp.float32) / jnp.sqrt(C * 9.0)
    b1 = jax.random.normal(k_b1, (C2,), jnp.float32) * 0.1
    w2 = jax.random.normal(k_w2, (C2, C2, 3, 3), jnp.float32) / jnp.sqrt(C2 * 9.0)
    b2 = jax.random.normal(k_b2, (C2,), jnp.float32) * 0.1

    # Exact-f32 path: auto strip sizing (single strip at toy shapes) and
    # forced multi-strip tiling (exercises the halo / padding / reassembly),
    # on even (H=16) and odd (H=15) post-conv extents (maxpool floor crop).
    for H in (16, 15):
        x = jax.random.normal(k_x, (N, C, H, H), dtype=jnp.float32)
        ref = jax.block_until_ready(_reference(x, w1, b1, w2, b2))
        Hp = (H - 4) // 2

        for strip_rows in (None, 2):          # None -> auto (whole image fits)
            out = jax.block_until_ready(
                contracting_block(x, w1, b1, w2, b2,
                                  max_strip_rows=strip_rows))
            assert out.shape == (N, C2, Hp, Hp), out.shape
            err = float(jnp.max(jnp.abs(out - ref)))
            assert jnp.allclose(out, ref, rtol=1e-4, atol=1e-4), err

    # bf16-operand path (f32 accumulate) — MXU-throughput config on all gens.
    x = jax.random.normal(k_x, (N, C, 16, 16), dtype=jnp.float32)
    ref = jax.block_until_ready(_reference(x, w1, b1, w2, b2))
    out_bf16 = jax.block_until_ready(
        contracting_block(x, w1, b1, w2, b2,
                          compute_dtype=jnp.bfloat16, max_strip_rows=2))
    err_bf16 = float(jnp.max(jnp.abs(out_bf16 - ref)))
    assert jnp.allclose(out_bf16, ref, rtol=5e-2, atol=1e-1), err_bf16

    print("KERNEL_OK")
</pallas_src>

<mosaic_0001>
module attributes {stable_mosaic.version = 11 : i64} {
  func.func @kernel(%arg0: i32, %arg1: memref<1x16x16x4xf32, #tpu.memory_space<vmem>>, %arg2: memref<36x8xf32, #tpu.memory_space<vmem>>, %arg3: memref<1x8xf32, #tpu.memory_space<vmem>>, %arg4: memref<72x8xf32, #tpu.memory_space<vmem>>, %arg5: memref<1x8xf32, #tpu.memory_space<vmem>>, %arg6: memref<1x6x6x8xf32, #tpu.memory_space<vmem>>) attributes {dimension_semantics = [#tpu.dimension_semantics<parallel>], iteration_bounds = array<i64: 2>, scalar_prefetch = 0 : i64, scratch_operands = 0 : i64, tpu.core_type = #tpu.core_type<tc>, window_params = [{transform_indices = @transform_0, window_bounds = array<i64: 1, 16, 16, 4>}, {pipeline_mode = #tpu.pipeline_mode<synchronous>, transform_indices = @transform_1, window_bounds = array<i64: 36, 8>}, {pipeline_mode = #tpu.pipeline_mode<synchronous>, transform_indices = @transform_2, window_bounds = array<i64: 1, 8>}, {pipeline_mode = #tpu.pipeline_mode<synchronous>, transform_indices = @transform_3, window_bounds = array<i64: 72, 8>}, {pipeline_mode = #tpu.pipeline_mode<synchronous>, transform_indices = @transform_4, window_bounds = array<i64: 1, 8>}, {transform_indices = @transform_5, window_bounds = array<i64: 1, 6, 6, 8>}]} {
    %c0 = arith.constant 0 : index
    %c0_0 = arith.constant 0 : index
    %c0_1 = arith.constant 0 : index
    %c0_2 = arith.constant 0 : index
    %0 = vector.load %arg1[%c0, %c0_0, %c0_1, %c0_2] : memref<1x16x16x4xf32, #tpu.memory_space<vmem>>, vector<1x16x16x4xf32>
    %1 = vector.shape_cast %0 : vector<1x16x16x4xf32> to vector<16x16x4xf32>
    %2 = vector.extract_strided_slice %1 {offsets = [0, 0, 0], sizes = [16, 14, 4], strides = [1, 1, 1]} : vector<16x16x4xf32> to vector<16x14x4xf32>
    %3 = vector.extract_strided_slice %1 {offsets = [0, 1, 0], sizes = [16, 14, 4], strides = [1, 1, 1]} : vector<16x16x4xf32> to vector<16x14x4xf32>
    %4 = vector.extract_strided_slice %1 {offsets = [0, 2, 0], sizes = [16, 14, 4], strides = [1, 1, 1]} : vector<16x16x4xf32> to vector<16x14x4xf32>
    %5 = tpu.concatenate %2, %3, %4 in 2 : vector<16x14x4xf32>, vector<16x14x4xf32>, vector<16x14x4xf32> -> vector<16x14x12xf32>
    %6 = vector.extract_strided_slice %5 {offsets = [0, 0, 0], sizes = [14, 14, 12], strides = [1, 1, 1]} : vector<16x14x12xf32> to vector<14x14x12xf32>
    %7 = vector.extract_strided_slice %5 {offsets = [1, 0, 0], sizes = [14, 14, 12], strides = [1, 1, 1]} : vector<16x14x12xf32> to vector<14x14x12xf32>
    %8 = vector.extract_strided_slice %5 {offsets = [2, 0, 0], sizes = [14, 14, 12], strides = [1, 1, 1]} : vector<16x14x12xf32> to vector<14x14x12xf32>
    %9 = tpu.concatenate %6, %7, %8 in 2 : vector<14x14x12xf32>, vector<14x14x12xf32>, vector<14x14x12xf32> -> vector<14x14x36xf32>
    %cst = arith.constant 0.000000e+00 : f32
    %10 = vector.broadcast %cst : f32 to vector<14x2x36xf32>
    %11 = tpu.concatenate %9, %10 in 1 : vector<14x14x36xf32>, vector<14x2x36xf32> -> vector<14x16x36xf32>
    %12 = vector.shape_cast %11 : vector<14x16x36xf32> to vector<224x36xf32>
    %c0_3 = arith.constant 0 : index
    %c0_4 = arith.constant 0 : index
    %13 = vector.load %arg2[%c0_3, %c0_4] : memref<36x8xf32, #tpu.memory_space<vmem>>, vector<36x8xf32>
    %cst_5 = arith.constant dense<0.000000e+00> : vector<224x8xf32>
    %14 = tpu.matmul %12, %13, %cst_5 {dimension_numbers = #tpu.dot_dimension_numbers<[1], [0], [0], [1], [0, 0, 1, 1], [], []>} : vector<224x36xf32>, vector<36x8xf32>, vector<224x8xf32> -> vector<224x8xf32>
    %c0_6 = arith.constant 0 : index
    %c0_7 = arith.constant 0 : index
    %15 = vector.load %arg3[%c0_6, %c0_7] : memref<1x8xf32, #tpu.memory_space<vmem>>, vector<1x8xf32>
    %16 = vector.shape_cast %15 : vector<1x8xf32> to vector<8xf32>
    %17 = vector.shape_cast %16 : vector<8xf32> to vector<1x8xf32>
    %18 = vector.broadcast %17 : vector<1x8xf32> to vector<224x8xf32>
    %19 = arith.addf %14, %18 : vector<224x8xf32>
    %cst_8 = arith.constant 0.000000e+00 : f32
    %20 = vector.broadcast %cst_8 : f32 to vector<224x8xf32>
    %21 = arith.maximumf %19, %20 : vector<224x8xf32>
    %22 = vector.shape_cast %21 : vector<224x8xf32> to vector<14x16x8xf32>
    %23 = vector.extract_strided_slice %22 {offsets = [0, 0, 0], sizes = [14, 14, 8], strides = [1, 1, 1]} : vector<14x16x8xf32> to vector<14x14x8xf32>
    %24 = vector.extract_strided_slice %23 {offsets = [0, 0, 0], sizes = [14, 12, 8], strides = [1, 1, 1]} : vector<14x14x8xf32> to vector<14x12x8xf32>
    %25 = vector.extract_strided_slice %23 {offsets = [0, 1, 0], sizes = [14, 12, 8], strides = [1, 1, 1]} : vector<14x14x8xf32> to vector<14x12x8xf32>
    %26 = vector.extract_strided_slice %23 {offsets = [0, 2, 0], sizes = [14, 12, 8], strides = [1, 1, 1]} : vector<14x14x8xf32> to vector<14x12x8xf32>
    %27 = tpu.concatenate %24, %25, %26 in 2 : vector<14x12x8xf32>, vector<14x12x8xf32>, vector<14x12x8xf32> -> vector<14x12x24xf32>
    %28 = vector.extract_strided_slice %27 {offsets = [0, 0, 0], sizes = [12, 12, 24], strides = [1, 1, 1]} : vector<14x12x24xf32> to vector<12x12x24xf32>
    %29 = vector.extract_strided_slice %27 {offsets = [1, 0, 0], sizes = [12, 12, 24], strides = [1, 1, 1]} : vector<14x12x24xf32> to vector<12x12x24xf32>
    %30 = vector.extract_strided_slice %27 {offsets = [2, 0, 0], sizes = [12, 12, 24], strides = [1, 1, 1]} : vector<14x12x24xf32> to vector<12x12x24xf32>
    %31 = tpu.concatenate %28, %29, %30 in 2 : vector<12x12x24xf32>, vector<12x12x24xf32>, vector<12x12x24xf32> -> vector<12x12x72xf32>
    %cst_9 = arith.constant 0.000000e+00 : f32
    %32 = vector.broadcast %cst_9 : f32 to vector<12x4x72xf32>
    %33 = tpu.concatenate %31, %32 in 1 : vector<12x12x72xf32>, vector<12x4x72xf32> -> vector<12x16x72xf32>
    %34 = vector.shape_cast %33 : vector<12x16x72xf32> to vector<192x72xf32>
    %c0_10 = arith.constant 0 : index
    %c0_11 = arith.constant 0 : index
    %35 = vector.load %arg4[%c0_10, %c0_11] : memref<72x8xf32, #tpu.memory_space<vmem>>, vector<72x8xf32>
    %cst_12 = arith.constant dense<0.000000e+00> : vector<192x8xf32>
    %36 = tpu.matmul %34, %35, %cst_12 {dimension_numbers = #tpu.dot_dimension_numbers<[1], [0], [0], [1], [0, 0, 1, 1], [], []>} : vector<192x72xf32>, vector<72x8xf32>, vector<192x8xf32> -> vector<192x8xf32>
    %c0_13 = arith.constant 0 : index
    %c0_14 = arith.constant 0 : index
    %37 = vector.load %arg5[%c0_13, %c0_14] : memref<1x8xf32, #tpu.memory_space<vmem>>, vector<1x8xf32>
    %38 = vector.shape_cast %37 : vector<1x8xf32> to vector<8xf32>
    %39 = vector.shape_cast %38 : vector<8xf32> to vector<1x8xf32>
    %40 = vector.broadcast %39 : vector<1x8xf32> to vector<192x8xf32>
    %41 = arith.addf %36, %40 : vector<192x8xf32>
    %cst_15 = arith.constant 0.000000e+00 : f32
    %42 = vector.broadcast %cst_15 : f32 to vector<192x8xf32>
    %43 = arith.maximumf %41, %42 : vector<192x8xf32>
    %44 = vector.shape_cast %43 : vector<192x8xf32> to vector<12x16x8xf32>
    %45 = vector.extract_strided_slice %44 {offsets = [0, 0, 0], sizes = [12, 12, 8], strides = [1, 1, 1]} : vector<12x16x8xf32> to vector<12x12x8xf32>
    %46 = vector.shape_cast %45 : vector<12x12x8xf32> to vector<6x2x12x8xf32>
    %47 = vector.extract_strided_slice %46 {offsets = [0, 0, 0, 0], sizes = [6, 1, 12, 8], strides = [1, 1, 1, 1]} : vector<6x2x12x8xf32> to vector<6x1x12x8xf32>
    %48 = vector.shape_cast %47 : vector<6x1x12x8xf32> to vector<6x12x8xf32>
    %49 = vector.extract_strided_slice %46 {offsets = [0, 1, 0, 0], sizes = [6, 1, 12, 8], strides = [1, 1, 1, 1]} : vector<6x2x12x8xf32> to vector<6x1x12x8xf32>
    %50 = vector.shape_cast %49 : vector<6x1x12x8xf32> to vector<6x12x8xf32>
    %51 = arith.maximumf %48, %50 : vector<6x12x8xf32>
    %52 = vector.shape_cast %51 : vector<6x12x8xf32> to vector<6x6x2x8xf32>
    %cst_16 = arith.constant dense<0xFF800000> : vector<6x6x8xf32>
    %53 = vector.multi_reduction <maximumf>, %52, %cst_16 [2] : vector<6x6x2x8xf32> to vector<6x6x8xf32>
    %c0_17 = arith.constant 0 : index
    %c0_18 = arith.constant 0 : index
    %c0_19 = arith.constant 0 : index
    %c0_20 = arith.constant 0 : index
    %54 = vector.load %arg6[%c0_17, %c0_18, %c0_19, %c0_20] : memref<1x6x6x8xf32, #tpu.memory_space<vmem>>, vector<1x6x6x8xf32>
    %55 = vector.shape_cast %54 : vector<1x6x6x8xf32> to vector<6x6x8xf32>
    %56 = vector.shape_cast %53 : vector<6x6x8xf32> to vector<1x6x6x8xf32>
    tpu.vector_store %arg6[%c0_17, %c0_18, %c0_19, %c0_20], %56 {strides = array<i32>} : memref<1x6x6x8xf32, #tpu.memory_space<vmem>>, vector<1x6x6x8xf32>,
    return
  }
  func.func @transform_0(%arg0: i32) -> (i32, i32, i32, i32) {
    %c0_i32 = arith.constant 0 : i32
    %c0_i32_0 = arith.constant 0 : i32
    %c0_i32_1 = arith.constant 0 : i32
    %c0_i32_2 = arith.constant 0 : i32
    return %arg0, %c0_i32, %c0_i32_0, %c0_i32_1 : i32, i32, i32, i32
  }
  func.func @transform_1(%arg0: i32) -> (i32, i32) {
    %c0_i32 = arith.constant 0 : i32
    %c0_i32_0 = arith.constant 0 : i32
    %c0_i32_1 = arith.constant 0 : i32
    return %c0_i32, %c0_i32_0 : i32, i32
  }
  func.func @transform_2(%arg0: i32) -> (i32, i32) {
    %c0_i32 = arith.constant 0 : i32
    %c0_i32_0 = arith.constant 0 : i32
    %c0_i32_1 = arith.constant 0 : i32
    return %c0_i32, %c0_i32_0 : i32, i32
  }
  func.func @transform_3(%arg0: i32) -> (i32, i32) {
    %c0_i32 = arith.constant 0 : i32
    %c0_i32_0 = arith.constant 0 : i32
    %c0_i32_1 = arith.constant 0 : i32
    return %c0_i32, %c0_i32_0 : i32, i32
  }
  func.func @transform_4(%arg0: i32) -> (i32, i32) {
    %c0_i32 = arith.constant 0 : i32
    %c0_i32_0 = arith.constant 0 : i32
    %c0_i32_1 = arith.constant 0 : i32
    return %c0_i32, %c0_i32_0 : i32, i32
  }
  func.func @transform_5(%arg0: i32) -> (i32, i32, i32, i32) {
    %c0_i32 = arith.constant 0 : i32
    %c0_i32_0 = arith.constant 0 : i32
    %c0_i32_1 = arith.constant 0 : i32
    %c0_i32_2 = arith.constant 0 : i32
    return %arg0, %c0_i32, %c0_i32_0, %c0_i32_1 : i32, i32, i32, i32
  }
}

</mosaic_0001>

<llo_original>
// kernel: tpu_custom_call.1
$region0: #{tpu_custom_call.1}
  #allocation0 [shape = 'u32[]', space=smem, size = 0x4, offset = 0x4, fixed_abs, tag = 'smem constant byte address 0x4 - core index']
  #allocation1 [shape = 'u32[144,128]{1,0:T(1,128)}', space=vmem, size = 0x12000, scoped, tag = 'internal scratch']
  %s0 = inlined_call_operand.vmem [shape: f32[2,16,16,4], index: 0, kind: input, shape index: {}]
  %s1 = inlined_call_operand.vmem [shape: f32[36,8], index: 1, kind: input, shape index: {}]
  %s2 = inlined_call_operand.vmem [shape: f32[1,8], index: 2, kind: input, shape index: {}]
  %s3 = inlined_call_operand.vmem [shape: f32[72,8], index: 3, kind: input, shape index: {}]
  %s4 = inlined_call_operand.vmem [shape: f32[1,8], index: 4, kind: input, shape index: {}]
  %s5 = inlined_call_operand.vmem [shape: f32[2,6,6,8], index: 5, kind: output, shape index: {}]
  %s6 = sld [smem:[#allocation0]]
  $region53: #{tpu_custom_call.1} parent=0
    _
  %s8 = ssub.s32 1, %s6
  %s9 = scalar_select 0, %s8, %s6
  loop: start=0, step=1, limit=4
  $region2: #{tpu_custom_call.1} parent=0 // loop_pre_header
    _
  $region3: #{tpu_custom_call.1} parent=0 // loop_header
    %s11 = sphi 0, %s15
    %p12 = scmp.ge.s32.totalorder %s11, 4
    %s21 = sphi 0, %s23
    %s24 = sphi 0, %s21
    %s25 = sphi 0, %s24
    %s41 = sphi 0, %s25
    %s45 = sphi 0, %s45
    %s47 = sphi 0, %s45
    %s48 = sphi 0, %s47
    %s62 = sphi 0, %s48
    %s66 = sphi 0, %s66
    %s68 = sphi 0, %s66
    %s69 = sphi 0, %s68
    %s83 = sphi 0, %s69
    %s87 = sphi 0, %s87
    %s89 = sphi 0, %s87
    %s90 = sphi 0, %s89
    %s104 = sphi 0, %s90
    %s108 = sphi 0, %s108
    %s110 = sphi 0, %s108
    %s111 = sphi 0, %s110
    %s125 = sphi 0, %s111
    %s131 = sphi 0, %s133
    %s134 = sphi 0, %s131
    %s135 = sphi 0, %s134
    %s151 = sphi 0, %s135
  $region4: #{tpu_custom_call.1} parent=0 // loop_header_branch
    %14 = sbr.rel (%p12) target = $region8
  $region5: #{tpu_custom_call.1} parent=0 // loop_body
    %s16 = ssub.s32 %s11, 1
    %s17 = ssub.s32 %s11, 2
    %s18 = sadd.s32 %s11, 1
    %s19 = ssub.s32 %s11, %s18
    %p20 = scmp.eq.s32.totalorder %s19, 0
    %s22 = sadd.s32 %s21, 1
    %s23 = scalar_select %p20, %s21, %s22
    %p26 = pneg %p20
    %p27 = scmp.eq.s32.totalorder %s11, 1
    %p28 = por %p26, %p27
    %p29 = scmp.ne.s32.totalorder %s21, %s24
    %p30 = scmp.eq.s32.totalorder %s11, 0
    %p31 = por %p29, %p30
    %p32 = scmp.ne.s32.totalorder %s21, %s24
    %p33 = scmp.eq.s32.totalorder %s16, 1
    %p34 = por %p32, %p33
    %p35 = scmp.ne.s32.totalorder %s24, %s25
    %p36 = scmp.eq.s32.totalorder %s16, 0
    %p37 = por %p35, %p36
    %p38 = scmp.ne.s32.totalorder %s24, %s25
    %p39 = scmp.eq.s32.totalorder %s17, 1
    %p40 = por %p38, %p39
    %p42 = scmp.ne.s32.totalorder %s25, %s41
    %p43 = scmp.eq.s32.totalorder %s17, 0
    %p44 = por %p42, %p43
    %s46 = sadd.s32 %s45, 1
    %p49 = scmp.eq.s32.totalorder %s11, 1
    %p50 = scmp.ne.s32.totalorder %s45, %s47
    %p51 = scmp.eq.s32.totalorder %s11, 0
    %p52 = por %p50, %p51
    %p53 = scmp.ne.s32.totalorder %s45, %s47
    %p54 = scmp.eq.s32.totalorder %s16, 1
    %p55 = por %p53, %p54
    %p56 = scmp.ne.s32.totalorder %s47, %s48
    %p57 = scmp.eq.s32.totalorder %s16, 0
    %p58 = por %p56, %p57
    %p59 = scmp.ne.s32.totalorder %s47, %s48
    %p60 = scmp.eq.s32.totalorder %s17, 1
    %p61 = por %p59, %p60
    %p63 = scmp.ne.s32.totalorder %s48, %s62
    %p64 = scmp.eq.s32.totalorder %s17, 0
    %p65 = por %p63, %p64
    %s67 = sadd.s32 %s66, 1
    %p70 = scmp.eq.s32.totalorder %s11, 1
    %p71 = scmp.ne.s32.totalorder %s66, %s68
    %p72 = scmp.eq.s32.totalorder %s11, 0
    %p73 = por %p71, %p72
    %p74 = scmp.ne.s32.totalorder %s66, %s68
    %p75 = scmp.eq.s32.totalorder %s16, 1
    %p76 = por %p74, %p75
    %p77 = scmp.ne.s32.totalorder %s68, %s69
    %p78 = scmp.eq.s32.totalorder %s16, 0
    %p79 = por %p77, %p78
    %p80 = scmp.ne.s32.totalorder %s68, %s69
    %p81 = scmp.eq.s32.totalorder %s17, 1
    %p82 = por %p80, %p81
    %p84 = scmp.ne.s32.totalorder %s69, %s83
    %p85 = scmp.eq.s32.totalorder %s17, 0
    %p86 = por %p84, %p85
    %s88 = sadd.s32 %s87, 1
    %p91 = scmp.eq.s32.totalorder %s11, 1
    %p92 = scmp.ne.s32.totalorder %s87, %s89
    %p93 = scmp.eq.s32.totalorder %s11, 0
    %p94 = por %p92, %p93
    %p95 = scmp.ne.s32.totalorder %s87, %s89
    %p96 = scmp.eq.s32.totalorder %s16, 1
    %p97 = por %p95, %p96
    %p98 = scmp.ne.s32.totalorder %s89, %s90
    %p99 = scmp.eq.s32.totalorder %s16, 0
    %p100 = por %p98, %p99
    %p101 = scmp.ne.s32.totalorder %s89, %s90
    %p102 = scmp.eq.s32.totalorder %s17, 1
    %p103 = por %p101, %p102
    %p105 = scmp.ne.s32.totalorder %s90, %s104
    %p106 = scmp.eq.s32.totalorder %s17, 0
    %p107 = por %p105, %p106
    %s109 = sadd.s32 %s108, 1
    %p112 = scmp.eq.s32.totalorder %s11, 1
    %p113 = scmp.ne.s32.totalorder %s108, %s110
    %p114 = scmp.eq.s32.totalorder %s11, 0
    %p115 = por %p113, %p114
    %p116 = scmp.ne.s32.totalorder %s108, %s110
    %p117 = scmp.eq.s32.totalorder %s16, 1
    %p118 = por %p116, %p117
    %p119 = scmp.ne.s32.totalorder %s110, %s111
    %p120 = scmp.eq.s32.totalorder %s16, 0
    %p121 = por %p119, %p120
    %p122 = scmp.ne.s32.totalorder %s110, %s111
    %p123 = scmp.eq.s32.totalorder %s17, 1
    %p124 = por %p122, %p123
    %p126 = scmp.ne.s32.totalorder %s111, %s125
    %p127 = scmp.eq.s32.totalorder %s17, 0
    %p128 = por %p126, %p127
    %s129 = ssub.s32 %s11, %s18
    %p130 = scmp.eq.s32.totalorder %s129, 0
    %s132 = sadd.s32 %s131, 1
    %s133 = scalar_select %p130, %s131, %s132
    %p136 = pneg %p130
    %p137 = scmp.eq.s32.totalorder %s11, 1
    %p138 = por %p136, %p137
    %p139 = scmp.ne.s32.totalorder %s131, %s134
    %p140 = scmp.eq.s32.totalorder %s11, 0
    %p141 = por %p139, %p140
    %p142 = scmp.ne.s32.totalorder %s131, %s134
    %p143 = scmp.eq.s32.totalorder %s16, 1
    %p144 = por %p142, %p143
    %p145 = scmp.ne.s32.totalorder %s134, %s135
    %p146 = scmp.eq.s32.totalorder %s16, 0
    %p147 = por %p145, %p146
    %p148 = scmp.ne.s32.totalorder %s134, %s135
    %p149 = scmp.eq.s32.totalorder %s17, 1
    %p150 = por %p148, %p149
    %p152 = scmp.ne.s32.totalorder %s135, %s151
    %p153 = scmp.eq.s32.totalorder %s17, 0
    %p154 = por %p152, %p153
    %p155 = scmp.le.s32.totalorder 1, %s11
    %p156 = scmp.lt.s32.totalorder %s11, 3
    %p157 = pnand %p155, %p156
    %p158 = pneg %p157
    // Predicated region
    $region9: #{tpu_custom_call.1} parent=5 // pred_check
      _
    $region10: #{tpu_custom_call.1} parent=5 // pred_check_branch
      %160 = sbr.rel (%p157) target = $region12
    $region11: #{tpu_custom_call.1} parent=5 // pred_region
      %s161 = ssub.s32 %s11, 1
      // Predicated region
      $region13: #{tpu_custom_call.1} parent=11 // pred_check
        %p162 = pneg %p58
      $region14: #{tpu_custom_call.1} parent=11 // pred_check_branch
        %164 = sbr.rel (%p162) target = $region16
      $region15: #{tpu_custom_call.1} parent=11 // pred_region
        _
      $region16: #{tpu_custom_call.1} parent=11 // pred_fallthru
        _
      // Predicated region
      $region17: #{tpu_custom_call.1} parent=11 // pred_check
        %p165 = pneg %p79
      $region18: #{tpu_custom_call.1} parent=11 // pred_check_branch
        %167 = sbr.rel (%p165) target = $region20
      $region19: #{tpu_custom_call.1} parent=11 // pred_region
        _
      $region20: #{tpu_custom_call.1} parent=11 // pred_fallthru
        _
      // Predicated region
      $region21: #{tpu_custom_call.1} parent=11 // pred_check
        %p168 = pneg %p100
      $region22: #{tpu_custom_call.1} parent=11 // pred_check_branch
        %170 = sbr.rel (%p168) target = $region24
      $region23: #{tpu_custom_call.1} parent=11 // pred_region
        _
      $region24: #{tpu_custom_call.1} parent=11 // pred_fallthru
        _
      // Predicated region
      $region25: #{tpu_custom_call.1} parent=11 // pred_check
        %p171 = pneg %p121
      $region26: #{tpu_custom_call.1} parent=11 // pred_check_branch
        %173 = sbr.rel (%p171) target = $region28
      $region27: #{tpu_custom_call.1} parent=11 // pred_region
        _
      $region28: #{tpu_custom_call.1} parent=11 // pred_fallthru
        _
    $region12: #{tpu_custom_call.1} parent=5 // pred_fallthru
      _
    %p174 = scmp.lt.s32.totalorder %s11, 2
    // Predicated region
    $region29: #{tpu_custom_call.1} parent=5 // pred_check
      %p175 = pneg %p174
    $region30: #{tpu_custom_call.1} parent=5 // pred_check_branch
      %177 = sbr.rel (%p175) target = $region32
    $region31: #{tpu_custom_call.1} parent=5 // pred_region
      // Predicated region
      $region33: #{tpu_custom_call.1} parent=31 // pred_check
        %p178 = pneg %p31
      $region34: #{tpu_custom_call.1} parent=31 // pred_check_branch
        %180 = sbr.rel (%p178) target = $region36
      $region35: #{tpu_custom_call.1} parent=31 // pred_region
        %p181 = scmp.lt.s32.totalorder %s11, 1
        %s182 = scalar_select %p181, %s11, 1
        %s183 = smul.addr %s182, 32
        %s184 = smul.addr %s183, 8
        %s185 = scalar_lea.vmem %s0, %s184
      $region36: #{tpu_custom_call.1} parent=31 // pred_fallthru
        _
    $region32: #{tpu_custom_call.1} parent=5 // pred_fallthru
      _
    %p186 = scmp.le.s32.totalorder 1, %s11
    %p187 = scmp.lt.s32.totalorder %s11, 3
    %p188 = pnand %p186, %p187
    %p189 = pneg %p188
    // Predicated region
    $region37: #{tpu_custom_call.1} parent=5 // pred_check
      _
    $region38: #{tpu_custom_call.1} parent=5 // pred_check_branch
      %191 = sbr.rel (%p188) target = $region40
    $region39: #{tpu_custom_call.1} parent=5 // pred_region
      %s192 = ssub.s32 %s11, 1
      %p193 = scmp.lt.s32.totalorder %s16, 1
      %s194 = scalar_select %p193, %s16, 1
      %s195 = smul.addr %s194, 32
      %s196 = smul.addr %s195, 8
      %s197 = scalar_lea.vmem %s0, %s196
      %p198 = pneg %p37
      %p199 = pneg %p34
      %p200 = pneg %p58
      %p201 = pneg %p55
      %p202 = pneg %p79
      %p203 = pneg %p76
      %p204 = pneg %p100
      %p205 = pneg %p97
      %p206 = pneg %p121
      %p207 = pneg %p118
      %p208 = pneg %p147
      %p209 = pneg %p144
      %p210 = scmp.lt.s32.totalorder %s16, 1
      %s211 = scalar_select %p210, %s16, 1
      %s212 = smul.addr %s211, 6
      %s213 = smul.addr %s212, 8
      %s214 = scalar_lea.vmem %s5, %s213
      %p215 = scmp.lt.s32.totalorder %s16, 1
      %s216 = scalar_select %p215, %s16, 1
      %s217 = smul.addr %s216, 32
      %s218 = smul.addr %s217, 8
      %s219 = scalar_lea.vmem %s0, %s218
      %p220 = scmp.lt.s32.totalorder %s16, 1
      %s221 = scalar_select %p220, %s16, 1
      %s222 = smul.addr %s221, 6
      %s223 = smul.addr %s222, 8
      %s224 = scalar_lea.vmem %s5, %s223
      %v225 = vld [vmem:[%s219] sm:$0xff]
      %v226 = vld [vmem:[%s219 + $0x8] sm:$0xff]
      %v227 = vld [vmem:[%s219 + $0x10] sm:$0xff]
      %v228 = vld [vmem:[%s219 + $0x18] sm:$0xff]
      %v229 = vld [vmem:[%s219 + $0x20] sm:$0xff]
      %v230 = vld [vmem:[%s219 + $0x28] sm:$0xff]
      %v231 = vld [vmem:[%s219 + $0x30] sm:$0xff]
      %v232 = vld [vmem:[%s219 + $0x38] sm:$0xff]
      %v233 = vld [vmem:[%s219 + $0x40] sm:$0xff]
      %v234 = vld [vmem:[%s219 + $0x48] sm:$0xff]
      %v235 = vld [vmem:[%s219 + $0x50] sm:$0xff]
      %v236 = vld [vmem:[%s219 + $0x58] sm:$0xff]
      %v237 = vld [vmem:[%s219 + $0x60] sm:$0xff]
      %v238 = vld [vmem:[%s219 + $0x68] sm:$0xff]
      %v239 = vld [vmem:[%s219 + $0x70] sm:$0xff]
      %v240 = vld [vmem:[%s219 + $0x78] sm:$0xff]
      %v241 = vld [vmem:[%s219 + $0x80] sm:$0xff]
      %v242 = vld [vmem:[%s219 + $0x88] sm:$0xff]
      %v243 = vld [vmem:[%s219 + $0x90] sm:$0xff]
      %v244 = vld [vmem:[%s219 + $0x98] sm:$0xff]
      %v245 = vld [vmem:[%s219 + $0xa0] sm:$0xff]
      %v246 = vld [vmem:[%s219 + $0xa8] sm:$0xff]
      %v247 = vld [vmem:[%s219 + $0xb0] sm:$0xff]
      %v248 = vld [vmem:[%s219 + $0xb8] sm:$0xff]
      %v249 = vld [vmem:[%s219 + $0xc0] sm:$0xff]
      %v250 = vld [vmem:[%s219 + $0xc8] sm:$0xff]
      %v251 = vld [vmem:[%s219 + $0xd0] sm:$0xff]
      %v252 = vld [vmem:[%s219 + $0xd8] sm:$0xff]
      %v253 = vld [vmem:[%s219 + $0xe0] sm:$0xff]
      %v254 = vld [vmem:[%s219 + $0xe8] sm:$0xff]
      %v255 = vld [vmem:[%s219 + $0xf0] sm:$0xff]
      %v256 = vld [vmem:[%s219 + $0xf8] sm:$0xff]
      %vm289 = vcmask 1046528
      %v290 = vrot.slane %v225, 1
      %v291 = vrot.slane %v226, 1
      %v292 = vsel %vm289, %v290, %v291
      %v293 = vrot.slane %v227, 1
      %v294 = vrot.slane %v228, 1
      %v295 = vsel %vm289, %v293, %v294
      %v296 = vrot.slane %v229, 1
      %v297 = vrot.slane %v230, 1
      %v298 = vsel %vm289, %v296, %v297
      %v299 = vrot.slane %v231, 1
      %v300 = vrot.slane %v232, 1
      %v301 = vsel %vm289, %v299, %v300
      %v302 = vrot.slane %v233, 1
      %v303 = vrot.slane %v234, 1
      %v304 = vsel %vm289, %v302, %v303
      %v305 = vrot.slane %v235, 1
      %v306 = vrot.slane %v236, 1
      %v307 = vsel %vm289, %v305, %v306
      %v308 = vrot.slane %v237, 1
      %v309 = vrot.slane %v238, 1
      %v310 = vsel %vm289, %v308, %v309
      %v311 = vrot.slane %v239, 1
      %v312 = vrot.slane %v240, 1
      %v313 = vsel %vm289, %v311, %v312
      %v314 = vrot.slane %v241, 1
      %v315 = vrot.slane %v242, 1
      %v316 = vsel %vm289, %v314, %v315
      %v317 = vrot.slane %v243, 1
      %v318 = vrot.slane %v244, 1
      %v319 = vsel %vm289, %v317, %v318
      %v320 = vrot.slane %v245, 1
      %v321 = vrot.slane %v246, 1
      %v322 = vsel %vm289, %v320, %v321
      %v323 = vrot.slane %v247, 1
      %v324 = vrot.slane %v248, 1
      %v325 = vsel %vm289, %v323, %v324
      %v326 = vrot.slane %v249, 1
      %v327 = vrot.slane %v250, 1
      %v328 = vsel %vm289, %v326, %v327
      %v329 = vrot.slane %v251, 1
      %v330 = vrot.slane %v252, 1
      %v331 = vsel %vm289, %v329, %v330
      %v332 = vrot.slane %v253, 1
      %v333 = vrot.slane %v254, 1
      %v334 = vsel %vm289, %v332, %v333
      %v335 = vrot.slane %v255, 1
      %v336 = vrot.slane %v256, 1
      %v337 = vsel %vm289, %v335, %v336
      %338 = vrot.lane.b32.xlu0 %v292, 4
      %v339 = vpop.permute.xlu0 %338
      %340 = vrot.lane.b32.xlu0 %v291, 4
      %v341 = vpop.permute.xlu0 %340
      %342 = vrot.lane.b32.xlu0 %v295, 4
      %v343 = vpop.permute.xlu0 %342
      %344 = vrot.lane.b32.xlu0 %v294, 4
      %v345 = vpop.permute.xlu0 %344
      %346 = vrot.lane.b32.xlu0 %v298, 4
      %v347 = vpop.permute.xlu0 %346
      %348 = vrot.lane.b32.xlu0 %v297, 4
      %v349 = vpop.permute.xlu0 %348
      %350 = vrot.lane.b32.xlu0 %v301, 4
      %v351 = vpop.permute.xlu0 %350
      %352 = vrot.lane.b32.xlu0 %v300, 4
      %v353 = vpop.permute.xlu0 %352
      %354 = vrot.lane.b32.xlu0 %v304, 4
      %v355 = vpop.permute.xlu0 %354
      %356 = vrot.lane.b32.xlu0 %v303, 4
      %v357 = vpop.permute.xlu0 %356
      %358 = vrot.lane.b32.xlu0 %v307, 4
      %v359 = vpop.permute.xlu0 %358
      %360 = vrot.lane.b32.xlu0 %v306, 4
      %v361 = vpop.permute.xlu0 %360
      %362 = vrot.lane.b32.xlu0 %v310, 4
      %v363 = vpop.permute.xlu0 %362
      %364 = vrot.lane.b32.xlu0 %v309, 4
      %v365 = vpop.permute.xlu0 %364
      %366 = vrot.lane.b32.xlu0 %v313, 4
      %v367 = vpop.permute.xlu0 %366
      %368 = vrot.lane.b32.xlu0 %v312, 4
      %v369 = vpop.permute.xlu0 %368
      %370 = vrot.lane.b32.xlu0 %v316, 4
      %v371 = vpop.permute.xlu0 %370
      %372 = vrot.lane.b32.xlu0 %v315, 4
      %v373 = vpop.permute.xlu0 %372
      %374 = vrot.lane.b32.xlu0 %v319, 4
      %v375 = vpop.permute.xlu0 %374
      %376 = vrot.lane.b32.xlu0 %v318, 4
      %v377 = vpop.permute.xlu0 %376
      %378 = vrot.lane.b32.xlu0 %v322, 4
      %v379 = vpop.permute.xlu0 %378
      %380 = vrot.lane.b32.xlu0 %v321, 4
      %v381 = vpop.permute.xlu0 %380
      %382 = vrot.lane.b32.xlu0 %v325, 4
      %v383 = vpop.permute.xlu0 %382
      %384 = vrot.lane.b32.xlu0 %v324, 4
      %v385 = vpop.permute.xlu0 %384
      %386 = vrot.lane.b32.xlu0 %v328, 4
      %v387 = vpop.permute.xlu0 %386
      %388 = vrot.lane.b32.xlu0 %v327, 4
      %v389 = vpop.permute.xlu0 %388
      %390 = vrot.lane.b32.xlu0 %v331, 4
      %v391 = vpop.permute.xlu0 %390
      %392 = vrot.lane.b32.xlu0 %v330, 4
      %v393 = vpop.permute.xlu0 %392
      %394 = vrot.lane.b32.xlu0 %v334, 4
      %v395 = vpop.permute.xlu0 %394
      %396 = vrot.lane.b32.xlu0 %v333, 4
      %v397 = vpop.permute.xlu0 %396
      %398 = vrot.lane.b32.xlu0 %v337, 4
      %v399 = vpop.permute.xlu0 %398
      %400 = vrot.lane.b32.xlu0 %v336, 4
      %v401 = vpop.permute.xlu0 %400
      %vm434 = vcmask 1045504
      %v435 = vrot.slane %v225, 2
      %v436 = vrot.slane %v226, 2
      %v437 = vsel %vm434, %v435, %v436
      %v438 = vrot.slane %v227, 2
      %v439 = vrot.slane %v228, 2
      %v440 = vsel %vm434, %v438, %v439
      %v441 = vrot.slane %v229, 2
      %v442 = vrot.slane %v230, 2
      %v443 = vsel %vm434, %v441, %v442
      %v444 = vrot.slane %v231, 2
      %v445 = vrot.slane %v232, 2
      %v446 = vsel %vm434, %v444, %v445
      %v447 = vrot.slane %v233, 2
      %v448 = vrot.slane %v234, 2
      %v449 = vsel %vm434, %v447, %v448
      %v450 = vrot.slane %v235, 2
      %v451 = vrot.slane %v236, 2
      %v452 = vsel %vm434, %v450, %v451
      %v453 = vrot.slane %v237, 2
      %v454 = vrot.slane %v238, 2
      %v455 = vsel %vm434, %v453, %v454
      %v456 = vrot.slane %v239, 2
      %v457 = vrot.slane %v240, 2
      %v458 = vsel %vm434, %v456, %v457
      %v459 = vrot.slane %v241, 2
      %v460 = vrot.slane %v242, 2
      %v461 = vsel %vm434, %v459, %v460
      %v462 = vrot.slane %v243, 2
      %v463 = vrot.slane %v244, 2
      %v464 = vsel %vm434, %v462, %v463
      %v465 = vrot.slane %v245, 2
      %v466 = vrot.slane %v246, 2
      %v467 = vsel %vm434, %v465, %v466
      %v468 = vrot.slane %v247, 2
      %v469 = vrot.slane %v248, 2
      %v470 = vsel %vm434, %v468, %v469
      %v471 = vrot.slane %v249, 2
      %v472 = vrot.slane %v250, 2
      %v473 = vsel %vm434, %v471, %v472
      %v474 = vrot.slane %v251, 2
      %v475 = vrot.slane %v252, 2
      %v476 = vsel %vm434, %v474, %v475
      %v477 = vrot.slane %v253, 2
      %v478 = vrot.slane %v254, 2
      %v479 = vsel %vm434, %v477, %v478
      %v480 = vrot.slane %v255, 2
      %v481 = vrot.slane %v256, 2
      %v482 = vsel %vm434, %v480, %v481
      %483 = vrot.lane.b32.xlu0 %v437, 8
      %v484 = vpop.permute.xlu0 %483
      %485 = vrot.lane.b32.xlu0 %v436, 8
      %v486 = vpop.permute.xlu0 %485
      %487 = vrot.lane.b32.xlu0 %v440, 8
      %v488 = vpop.permute.xlu0 %487
      %489 = vrot.lane.b32.xlu0 %v439, 8
      %v490 = vpop.permute.xlu0 %489
      %491 = vrot.lane.b32.xlu0 %v443, 8
      %v492 = vpop.permute.xlu0 %491
      %493 = vrot.lane.b32.xlu0 %v442, 8
      %v494 = vpop.permute.xlu0 %493
      %495 = vrot.lane.b32.xlu0 %v446, 8
      %v496 = vpop.permute.xlu0 %495
      %497 = vrot.lane.b32.xlu0 %v445, 8
      %v498 = vpop.permute.xlu0 %497
      %499 = vrot.lane.b32.xlu0 %v449, 8
      %v500 = vpop.permute.xlu0 %499
      %501 = vrot.lane.b32.xlu0 %v448, 8
      %v502 = vpop.permute.xlu0 %501
      %503 = vrot.lane.b32.xlu0 %v452, 8
      %v504 = vpop.permute.xlu0 %503
      %505 = vrot.lane.b32.xlu0 %v451, 8
      %v506 = vpop.permute.xlu0 %505
      %507 = vrot.lane.b32.xlu0 %v455, 8
      %v508 = vpop.permute.xlu0 %507
      %509 = vrot.lane.b32.xlu0 %v454, 8
      %v510 = vpop.permute.xlu0 %509
      %511 = vrot.lane.b32.xlu0 %v458, 8
      %v512 = vpop.permute.xlu0 %511
      %513 = vrot.lane.b32.xlu0 %v457, 8
      %v514 = vpop.permute.xlu0 %513
      %515 = vrot.lane.b32.xlu0 %v461, 8
      %v516 = vpop.permute.xlu0 %515
      %517 = vrot.lane.b32.xlu0 %v460, 8
      %v518 = vpop.permute.xlu0 %517
      %519 = vrot.lane.b32.xlu0 %v464, 8
      %v520 = vpop.permute.xlu0 %519
      %521 = vrot.lane.b32.xlu0 %v463, 8
      %v522 = vpop.permute.xlu0 %521
      %523 = vrot.lane.b32.xlu0 %v467, 8
      %v524 = vpop.permute.xlu0 %523
      %525 = vrot.lane.b32.xlu0 %v466, 8
      %v526 = vpop.permute.xlu0 %525
      %527 = vrot.lane.b32.xlu0 %v470, 8
      %v528 = vpop.permute.xlu0 %527
      %529 = vrot.lane.b32.xlu0 %v469, 8
      %v530 = vpop.permute.xlu0 %529
      %531 = vrot.lane.b32.xlu0 %v473, 8
      %v532 = vpop.permute.xlu0 %531
      %533 = vrot.lane.b32.xlu0 %v472, 8
      %v534 = vpop.permute.xlu0 %533
      %535 = vrot.lane.b32.xlu0 %v476, 8
      %v536 = vpop.permute.xlu0 %535
      %537 = vrot.lane.b32.xlu0 %v475, 8
      %v538 = vpop.permute.xlu0 %537
      %539 = vrot.lane.b32.xlu0 %v479, 8
      %v540 = vpop.permute.xlu0 %539
      %541 = vrot.lane.b32.xlu0 %v478, 8
      %v542 = vpop.permute.xlu0 %541
      %543 = vrot.lane.b32.xlu0 %v482, 8
      %v544 = vpop.permute.xlu0 %543
      %545 = vrot.lane.b32.xlu0 %v481, 8
      %v546 = vpop.permute.xlu0 %545
      %vm579 = vcmask 31744
      %v580 = vsel %vm579, %v225, %v339
      %v581 = vsel %vm579, %v226, %v341
      %v582 = vsel %vm579, %v227, %v343
      %v583 = vsel %vm579, %v228, %v345
      %v584 = vsel %vm579, %v229, %v347
      %v585 = vsel %vm579, %v230, %v349
      %v586 = vsel %vm579, %v231, %v351
      %v587 = vsel %vm579, %v232, %v353
      %v588 = vsel %vm579, %v233, %v355
      %v589 = vsel %vm579, %v234, %v357
      %v590 = vsel %vm579, %v235, %v359
      %v591 = vsel %vm579, %v236, %v361
      %v592 = vsel %vm579, %v237, %v363
      %v593 = vsel %vm579, %v238, %v365
      %v594 = vsel %vm579, %v239, %v367
      %v595 = vsel %vm579, %v240, %v369
      %v596 = vsel %vm579, %v241, %v371
      %v597 = vsel %vm579, %v242, %v373
      %v598 = vsel %vm579, %v243, %v375
      %v599 = vsel %vm579, %v244, %v377
      %v600 = vsel %vm579, %v245, %v379
      %v601 = vsel %vm579, %v246, %v381
      %v602 = vsel %vm579, %v247, %v383
      %v603 = vsel %vm579, %v248, %v385
      %v604 = vsel %vm579, %v249, %v387
      %v605 = vsel %vm579, %v250, %v389
      %v606 = vsel %vm579, %v251, %v391
      %v607 = vsel %vm579, %v252, %v393
      %v608 = vsel %vm579, %v253, %v395
      %v609 = vsel %vm579, %v254, %v397
      %v610 = vsel %vm579, %v255, %v399
      %v611 = vsel %vm579, %v256, %v401
      %vm612 = vcmask 64512
      %v613 = vsel %vm612, %v580, %v484
      %v614 = vsel %vm612, %v581, %v486
      %v615 = vsel %vm612, %v582, %v488
      %v616 = vsel %vm612, %v583, %v490
      %v617 = vsel %vm612, %v584, %v492
      %v618 = vsel %vm612, %v585, %v494
      %v619 = vsel %vm612, %v586, %v496
      %v620 = vsel %vm612, %v587, %v498
      %v621 = vsel %vm612, %v588, %v500
      %v622 = vsel %vm612, %v589, %v502
      %v623 = vsel %vm612, %v590, %v504
      %v624 = vsel %vm612, %v591, %v506
      %v625 = vsel %vm612, %v592, %v508
      %v626 = vsel %vm612, %v593, %v510
      %v627 = vsel %vm612, %v594, %v512
      %v628 = vsel %vm612, %v595, %v514
      %v629 = vsel %vm612, %v596, %v516
      %v630 = vsel %vm612, %v597, %v518
      %v631 = vsel %vm612, %v598, %v520
      %v632 = vsel %vm612, %v599, %v522
      %v633 = vsel %vm612, %v600, %v524
      %v634 = vsel %vm612, %v601, %v526
      %v635 = vsel %vm612, %v602, %v528
      %v636 = vsel %vm612, %v603, %v530
      %v637 = vsel %vm612, %v604, %v532
      %v638 = vsel %vm612, %v605, %v534
      %v639 = vsel %vm612, %v606, %v536
      %v640 = vsel %vm612, %v607, %v538
      %v641 = vsel %vm612, %v608, %v540
      %v642 = vsel %vm612, %v609, %v542
      %v643 = vsel %vm612, %v610, %v544
      %v644 = vsel %vm612, %v611, %v546
      %673 = vrot.lane.b32.xlu0 %v615, 12
      %v674 = vpop.permute.xlu0 %673
      %675 = vrot.lane.b32.xlu0 %v616, 12
      %v676 = vpop.permute.xlu0 %675
      %677 = vrot.lane.b32.xlu0 %v617, 12
      %v678 = vpop.permute.xlu0 %677
      %679 = vrot.lane.b32.xlu0 %v618, 12
      %v680 = vpop.permute.xlu0 %679
      %681 = vrot.lane.b32.xlu0 %v619, 12
      %v682 = vpop.permute.xlu0 %681
      %683 = vrot.lane.b32.xlu0 %v620, 12
      %v684 = vpop.permute.xlu0 %683
      %685 = vrot.lane.b32.xlu0 %v621, 12
      %v686 = vpop.permute.xlu0 %685
      %687 = vrot.lane.b32.xlu0 %v622, 12
      %v688 = vpop.permute.xlu0 %687
      %689 = vrot.lane.b32.xlu0 %v623, 12
      %v690 = vpop.permute.xlu0 %689
      %691 = vrot.lane.b32.xlu0 %v624, 12
      %v692 = vpop.permute.xlu0 %691
      %693 = vrot.lane.b32.xlu0 %v625, 12
      %v694 = vpop.permute.xlu0 %693
      %695 = vrot.lane.b32.xlu0 %v626, 12
      %v696 = vpop.permute.xlu0 %695
      %697 = vrot.lane.b32.xlu0 %v627, 12
      %v698 = vpop.permute.xlu0 %697
      %699 = vrot.lane.b32.xlu0 %v628, 12
      %v700 = vpop.permute.xlu0 %699
      %701 = vrot.lane.b32.xlu0 %v629, 12
      %v702 = vpop.permute.xlu0 %701
      %703 = vrot.lane.b32.xlu0 %v630, 12
      %v704 = vpop.permute.xlu0 %703
      %705 = vrot.lane.b32.xlu0 %v631, 12
      %v706 = vpop.permute.xlu0 %705
      %707 = vrot.lane.b32.xlu0 %v632, 12
      %v708 = vpop.permute.xlu0 %707
      %709 = vrot.lane.b32.xlu0 %v633, 12
      %v710 = vpop.permute.xlu0 %709
      %711 = vrot.lane.b32.xlu0 %v634, 12
      %v712 = vpop.permute.xlu0 %711
      %713 = vrot.lane.b32.xlu0 %v635, 12
      %v714 = vpop.permute.xlu0 %713
      %715 = vrot.lane.b32.xlu0 %v636, 12
      %v716 = vpop.permute.xlu0 %715
      %717 = vrot.lane.b32.xlu0 %v637, 12
      %v718 = vpop.permute.xlu0 %717
      %719 = vrot.lane.b32.xlu0 %v638, 12
      %v720 = vpop.permute.xlu0 %719
      %721 = vrot.lane.b32.xlu0 %v639, 12
      %v722 = vpop.permute.xlu0 %721
      %723 = vrot.lane.b32.xlu0 %v640, 12
      %v724 = vpop.permute.xlu0 %723
      %725 = vrot.lane.b32.xlu0 %v641, 12
      %v726 = vpop.permute.xlu0 %725
      %727 = vrot.lane.b32.xlu0 %v642, 12
      %v728 = vpop.permute.xlu0 %727
      %759 = vrot.lane.b32.xlu0 %v617, 24
      %v760 = vpop.permute.xlu0 %759
      %761 = vrot.lane.b32.xlu0 %v618, 24
      %v762 = vpop.permute.xlu0 %761
      %763 = vrot.lane.b32.xlu0 %v619, 24
      %v764 = vpop.permute.xlu0 %763
      %765 = vrot.lane.b32.xlu0 %v620, 24
      %v766 = vpop.permute.xlu0 %765
      %767 = vrot.lane.b32.xlu0 %v621, 24
      %v768 = vpop.permute.xlu0 %767
      %769 = vrot.lane.b32.xlu0 %v622, 24
      %v770 = vpop.permute.xlu0 %769
      %771 = vrot.lane.b32.xlu0 %v623, 24
      %v772 = vpop.permute.xlu0 %771
      %773 = vrot.lane.b32.xlu0 %v624, 24
      %v774 = vpop.permute.xlu0 %773
      %775 = vrot.lane.b32.xlu0 %v625, 24
      %v776 = vpop.permute.xlu0 %775
      %777 = vrot.lane.b32.xlu0 %v626, 24
      %v778 = vpop.permute.xlu0 %777
      %779 = vrot.lane.b32.xlu0 %v627, 24
      %v780 = vpop.permute.xlu0 %779
      %781 = vrot.lane.b32.xlu0 %v628, 24
      %v782 = vpop.permute.xlu0 %781
      %783 = vrot.lane.b32.xlu0 %v629, 24
      %v784 = vpop.permute.xlu0 %783
      %785 = vrot.lane.b32.xlu0 %v630, 24
      %v786 = vpop.permute.xlu0 %785
      %787 = vrot.lane.b32.xlu0 %v631, 24
      %v788 = vpop.permute.xlu0 %787
      %789 = vrot.lane.b32.xlu0 %v632, 24
      %v790 = vpop.permute.xlu0 %789
      %791 = vrot.lane.b32.xlu0 %v633, 24
      %v792 = vpop.permute.xlu0 %791
      %793 = vrot.lane.b32.xlu0 %v634, 24
      %v794 = vpop.permute.xlu0 %793
      %795 = vrot.lane.b32.xlu0 %v635, 24
      %v796 = vpop.permute.xlu0 %795
      %797 = vrot.lane.b32.xlu0 %v636, 24
      %v798 = vpop.permute.xlu0 %797
      %799 = vrot.lane.b32.xlu0 %v637, 24
      %v800 = vpop.permute.xlu0 %799
      %801 = vrot.lane.b32.xlu0 %v638, 24
      %v802 = vpop.permute.xlu0 %801
      %803 = vrot.lane.b32.xlu0 %v639, 24
      %v804 = vpop.permute.xlu0 %803
      %805 = vrot.lane.b32.xlu0 %v640, 24
      %v806 = vpop.permute.xlu0 %805
      %807 = vrot.lane.b32.xlu0 %v641, 24
      %v808 = vpop.permute.xlu0 %807
      %809 = vrot.lane.b32.xlu0 %v642, 24
      %v810 = vpop.permute.xlu0 %809
      %811 = vrot.lane.b32.xlu0 %v643, 24
      %v812 = vpop.permute.xlu0 %811
      %813 = vrot.lane.b32.xlu0 %v644, 24
      %v814 = vpop.permute.xlu0 %813
      %vm843 = vcmask 97280
      %v844 = vsel %vm843, %v613, %v674
      %v845 = vsel %vm843, %v614, %v676
      %v846 = vsel %vm843, %v615, %v678
      %v847 = vsel %vm843, %v616, %v680
      %v848 = vsel %vm843, %v617, %v682
      %v849 = vsel %vm843, %v618, %v684
      %v850 = vsel %vm843, %v619, %v686
      %v851 = vsel %vm843, %v620, %v688
      %v852 = vsel %vm843, %v621, %v690
      %v853 = vsel %vm843, %v622, %v692
      %v854 = vsel %vm843, %v623, %v694
      %v855 = vsel %vm843, %v624, %v696
      %v856 = vsel %vm843, %v625, %v698
      %v857 = vsel %vm843, %v626, %v700
      %v858 = vsel %vm843, %v627, %v702
      %v859 = vsel %vm843, %v628, %v704
      %v860 = vsel %vm843, %v629, %v706
      %v861 = vsel %vm843, %v630, %v708
      %v862 = vsel %vm843, %v631, %v710
      %v863 = vsel %vm843, %v632, %v712
      %v864 = vsel %vm843, %v633, %v714
      %v865 = vsel %vm843, %v634, %v716
      %v866 = vsel %vm843, %v635, %v718
      %v867 = vsel %vm843, %v636, %v720
      %v868 = vsel %vm843, %v637, %v722
      %v869 = vsel %vm843, %v638, %v724
      %v870 = vsel %vm843, %v639, %v726
      %v871 = vsel %vm843, %v640, %v728
      %vm872 = vcmask 195584
      %v873 = vsel %vm872, %v844, %v760
      %v874 = vsel %vm872, %v845, %v762
      %v875 = vsel %vm872, %v846, %v764
      %v876 = vsel %vm872, %v847, %v766
      %v877 = vsel %vm872, %v848, %v768
      %v878 = vsel %vm872, %v849, %v770
      %v879 = vsel %vm872, %v850, %v772
      %v880 = vsel %vm872, %v851, %v774
      %v881 = vsel %vm872, %v852, %v776
      %v882 = vsel %vm872, %v853, %v778
      %v883 = vsel %vm872, %v854, %v780
      %v884 = vsel %vm872, %v855, %v782
      %v885 = vsel %vm872, %v856, %v784
      %v886 = vsel %vm872, %v857, %v786
      %v887 = vsel %vm872, %v858, %v788
      %v888 = vsel %vm872, %v859, %v790
      %v889 = vsel %vm872, %v860, %v792
      %v890 = vsel %vm872, %v861, %v794
      %v891 = vsel %vm872, %v862, %v796
      %v892 = vsel %vm872, %v863, %v798
      %v893 = vsel %vm872, %v864, %v800
      %v894 = vsel %vm872, %v865, %v802
      %v895 = vsel %vm872, %v866, %v804
      %v896 = vsel %vm872, %v867, %v806
      %v897 = vsel %vm872, %v868, %v808
      %v898 = vsel %vm872, %v869, %v810
      %v899 = vsel %vm872, %v870, %v812
      %v900 = vsel %vm872, %v871, %v814
      %v901 = vsel %vm434, %v874, 0.0
      %v902 = vsel %vm434, %v876, 0.0
      %v903 = vsel %vm434, %v878, 0.0
      %v904 = vsel %vm434, %v880, 0.0
      %v905 = vsel %vm434, %v882, 0.0
      %v906 = vsel %vm434, %v884, 0.0
      %v907 = vsel %vm434, %v886, 0.0
      %v908 = vsel %vm434, %v888, 0.0
      %v909 = vsel %vm434, %v890, 0.0
      %v910 = vsel %vm434, %v892, 0.0
      %v911 = vsel %vm434, %v894, 0.0
      %v912 = vsel %vm434, %v896, 0.0
      %v913 = vsel %vm434, %v898, 0.0
      %v914 = vsel %vm434, %v900, 0.0
      %v915 = vld [vmem:[%s1] sm:$0xff]
      %v916 = vld [vmem:[%s1 + $0x8] sm:$0xff]
      %v917 = vld [vmem:[%s1 + $0x10] sm:$0xff]
      %v918 = vld [vmem:[%s1 + $0x18] sm:$0xff]
      %v919 = vld [vmem:[%s1 + $0x20] sm:$0xf]
      %v920 = vld [vmem:[%s2] sm:$0x1]
      %v922 = vlaneseq
      %v923 = vshrl.u32 %v922, 7
      %v924 = vsub.s32 0, %v923
      %v925 = vrot.slane %v920, %v924
      %vm927 = vcmask 293888
      %v929 = vsel %vm927, %v873, 0
      %v932 = vsel %vm927, %v901, 0
      %v935 = vsel %vm927, %v875, 0
      %v938 = vsel %vm927, %v902, 0
      %v941 = vsel %vm927, %v877, 0
      %v944 = vsel %vm927, %v903, 0
      %v947 = vsel %vm927, %v879, 0
      %v950 = vsel %vm927, %v904, 0
      %v953 = vsel %vm927, %v881, 0
      %v956 = vsel %vm927, %v905, 0
      %v959 = vsel %vm927, %v883, 0
      %v962 = vsel %vm927, %v906, 0
      %v965 = vsel %vm927, %v885, 0
      %v968 = vsel %vm927, %v907, 0
      %v971 = vsel %vm927, %v887, 0
      %v974 = vsel %vm927, %v908, 0
      %v977 = vsel %vm927, %v889, 0
      %v980 = vsel %vm927, %v909, 0
      %v983 = vsel %vm927, %v891, 0
      %v986 = vsel %vm927, %v910, 0
      %v989 = vsel %vm927, %v893, 0
      %v992 = vsel %vm927, %v911, 0
      %v995 = vsel %vm927, %v895, 0
      %v998 = vsel %vm927, %v912, 0
      %v1001 = vsel %vm927, %v897, 0
      %v1004 = vsel %vm927, %v913, 0
      %v1007 = vsel %vm927, %v899, 0
      %v1010 = vsel %vm927, %v914, 0
      %vm1012 = vcmask 1043456
      %v1014 = vsel %vm1012, %v919, 0
      %1016 = vmatprep.subr.mxu0 0.0
      %1017 = vmatpush1.msra.mxu0 %v915
      %1018 = vmatprep.subr.mxu0 0.0
      %1019 = vmatpush1.msra.mxu0 %v916
      %1020 = vmatprep.subr.mxu0 0.0
      %1021 = vmatpush1.msra.mxu0 %v917
      %1022 = vmatprep.subr.mxu0 0.0
      %1023 = vmatpush1.msra.mxu0 %v918
      %1024 = vmatprep.subr.mxu0 0.0
      %1025 = vmatpush1.msra.mxu0 %v1014
      %1026 = vmatprep.subr.mxu0 0.0
      %1027 = vmatpush1.msra.mxu0 0.0
      %1028 = vmatprep.subr.mxu0 0.0
      %1029 = vmatpush1.msra.mxu0 0.0
      %1030 = vmatprep.subr.mxu0 0.0
      %1031 = vmatpush1.msra.mxu0 0.0
      %1032 = vmatprep.subr.mxu0 0.0
      %1033 = vmatpush1.msra.mxu0 0.0
      %1034 = vmatprep.subr.mxu0 0.0
      %1035 = vmatpush1.msra.mxu0 0.0
      %1036 = vmatprep.subr.mxu0 0.0
      %1037 = vmatpush1.msra.mxu0 0.0
      %1038 = vmatprep.subr.mxu0 0.0
      %1039 = vmatpush1.msra.mxu0 0.0
      %1040 = vmatprep.subr.mxu0 0.0
      %1041 = vmatpush1.msra.mxu0 0.0
      %1042 = vmatprep.subr.mxu0 0.0
      %1043 = vmatpush1.msra.mxu0 0.0
      %1044 = vmatprep.subr.mxu0 0.0
      %1045 = vmatpush1.msra.mxu0 0.0
      %1046 = vmatprep.subr.mxu0 0.0
      %1047 = vmatpush1.msra.mxu0 0.0
      %1048 = vmatprep.subr.mxu0 0.0
      %1049 = vmatpush1.msra.mxu0 0.0
      %1050 = vmatprep.subr.mxu0 0.0
      %1051 = vmatpush1.msra.mxu0 0.0
      %1052 = vmatprep.subr.mxu0 0.0
      %1053 = vmatpush1.msra.mxu0 0.0
      %1054 = vmatprep.subr.mxu0 0.0
      %1055 = vmatpush1.msra.mxu0 0.0
      %1056 = vmatprep.subr.mxu0 0.0
      %1057 = vmatpush1.msra.mxu0 0.0
      %1058 = vmatprep.subr.mxu0 0.0
      %1059 = vmatpush1.msra.mxu0 0.0
      %1060 = vmatprep.subr.mxu0 0.0
      %1061 = vmatpush1.msra.mxu0 0.0
      %1062 = vmatprep.subr.mxu0 0.0
      %1063 = vmatpush1.msra.mxu0 0.0
      %1064 = vmatprep.subr.mxu0 0.0
      %1065 = vmatpush1.msra.mxu0 0.0
      %1066 = vmatprep.subr.mxu0 0.0
      %1067 = vmatpush1.msra.mxu0 0.0
      %1068 = vmatprep.subr.mxu0 0.0
      %1069 = vmatpush1.msra.mxu0 0.0
      %1070 = vmatprep.subr.mxu0 0.0
      %1071 = vmatpush1.msra.mxu0 0.0
      %1072 = vmatprep.subr.mxu0 0.0
      %1073 = vmatpush1.msra.mxu0 0.0
      %1074 = vmatprep.subr.mxu0 0.0
      %1075 = vmatpush1.msra.mxu0 0.0
      %1076 = vmatprep.subr.mxu0 0.0
      %1077 = vmatpush1.msra.mxu0 0.0
      %1078 = vmatprep.subr.mxu0 0.0
      %1079 = vmatpush1.msra.mxu0 0.0
      %1080 = vmatprep.mubr.f32.mxu0 0.0
      %1081 = vmatmul.mubr.f32.gmra.mrb[0].mxu0 %v929
      %v1082 = vpop.f32.mrb[0].mxu0
      %v1083 = vadd.f32 %v925, %v1082
      %v1084 = vpop.f32.mrb[0].mxu0
      %1085 = vmatprep.mubr.f32.mxu0 0.0
      %1086 = vmatmul.mubr.f32.gmra.mrb[0].mxu0 %v932
      %v1087 = vpop.f32.mrb[0].mxu0
      %v1088 = vadd.f32 %v925, %v1087
      %v1089 = vpop.f32.mrb[0].mxu0
      %1090 = vmatprep.mubr.f32.mxu0 0.0
      %1091 = vmatmul.mubr.f32.gmra.mrb[0].mxu0 %v935
      %v1092 = vpop.f32.mrb[0].mxu0
      %v1093 = vadd.f32 %v925, %v1092
      %v1094 = vpop.f32.mrb[0].mxu0
      %1095 = vmatprep.mubr.f32.mxu0 0.0
      %1096 = vmatmul.mubr.f32.gmra.mrb[0].mxu0 %v938
      %v1097 = vpop.f32.mrb[0].mxu0
      %v1098 = vadd.f32 %v925, %v1097
      %v1099 = vpop.f32.mrb[0].mxu0
      %1100 = vmatprep.mubr.f32.mxu0 0.0
      %1101 = vmatmul.mubr.f32.gmra.mrb[0].mxu0 %v941
      %v1102 = vpop.f32.mrb[0].mxu0
      %v1103 = vadd.f32 %v925, %v1102
      %v1104 = vpop.f32.mrb[0].mxu0
      %1105 = vmatprep.mubr.f32.mxu0 0.0
      %1106 = vmatmul.mubr.f32.gmra.mrb[0].mxu0 %v944
      %v1107 = vpop.f32.mrb[0].mxu0
      %v1108 = vadd.f32 %v925, %v1107
      %v1109 = vpop.f32.mrb[0].mxu0
      %1110 = vmatprep.mubr.f32.mxu0 0.0
      %1111 = vmatmul.mubr.f32.gmra.mrb[0].mxu0 %v947
      %v1112 = vpop.f32.mrb[0].mxu0
      %v1113 = vadd.f32 %v925, %v1112
      %v1114 = vpop.f32.mrb[0].mxu0
      %1115 = vmatprep.mubr.f32.mxu0 0.0
      %1116 = vmatmul.mubr.f32.gmra.mrb[0].mxu0 %v950
      %v1117 = vpop.f32.mrb[0].mxu0
      %v1118 = vadd.f32 %v925, %v1117
      %v1119 = vpop.f32.mrb[0].mxu0
      %1120 = vmatprep.mubr.f32.mxu0 0.0
      %1121 = vmatmul.mubr.f32.gmra.mrb[0].mxu0 %v953
      %v1122 = vpop.f32.mrb[0].mxu0
      %v1123 = vadd.f32 %v925, %v1122
      %v1124 = vpop.f32.mrb[0].mxu0
      %1125 = vmatprep.mubr.f32.mxu0 0.0
      %1126 = vmatmul.mubr.f32.gmra.mrb[0].mxu0 %v956
      %v1127 = vpop.f32.mrb[0].mxu0
      %v1128 = vadd.f32 %v925, %v1127
      %v1129 = vpop.f32.mrb[0].mxu0
      %1130 = vmatprep.mubr.f32.mxu0 0.0
      %1131 = vmatmul.mubr.f32.gmra.mrb[0].mxu0 %v959
      %v1132 = vpop.f32.mrb[0].mxu0
      %v1133 = vadd.f32 %v925, %v1132
      %v1134 = vpop.f32.mrb[0].mxu0
      %1135 = vmatprep.mubr.f32.mxu0 0.0
      %1136 = vmatmul.mubr.f32.gmra.mrb[0].mxu0 %v962
      %v1137 = vpop.f32.mrb[0].mxu0
      %v1138 = vadd.f32 %v925, %v1137
      %v1139 = vpop.f32.mrb[0].mxu0
      %1140 = vmatprep.mubr.f32.mxu0 0.0
      %1141 = vmatmul.mubr.f32.gmra.mrb[0].mxu0 %v965
      %v1142 = vpop.f32.mrb[0].mxu0
      %v1143 = vadd.f32 %v925, %v1142
      %v1144 = vpop.f32.mrb[0].mxu0
      %1145 = vmatprep.mubr.f32.mxu0 0.0
      %1146 = vmatmul.mubr.f32.gmra.mrb[0].mxu0 %v968
      %v1147 = vpop.f32.mrb[0].mxu0
      %v1148 = vadd.f32 %v925, %v1147
      %v1149 = vpop.f32.mrb[0].mxu0
      %1150 = vmatprep.mubr.f32.mxu0 0.0
      %1151 = vmatmul.mubr.f32.gmra.mrb[0].mxu0 %v971
      %v1152 = vpop.f32.mrb[0].mxu0
      %v1153 = vadd.f32 %v925, %v1152
      %v1154 = vpop.f32.mrb[0].mxu0
      %1155 = vmatprep.mubr.f32.mxu0 0.0
      %1156 = vmatmul.mubr.f32.gmra.mrb[0].mxu0 %v974
      %v1157 = vpop.f32.mrb[0].mxu0
      %v1158 = vadd.f32 %v925, %v1157
      %v1159 = vpop.f32.mrb[0].mxu0
      %1160 = vmatprep.mubr.f32.mxu0 0.0
      %1161 = vmatmul.mubr.f32.gmra.mrb[0].mxu0 %v977
      %v1162 = vpop.f32.mrb[0].mxu0
      %v1163 = vadd.f32 %v925, %v1162
      %v1164 = vpop.f32.mrb[0].mxu0
      %1165 = vmatprep.mubr.f32.mxu0 0.0
      %1166 = vmatmul.mubr.f32.gmra.mrb[0].mxu0 %v980
      %v1167 = vpop.f32.mrb[0].mxu0
      %v1168 = vadd.f32 %v925, %v1167
      %v1169 = vpop.f32.mrb[0].mxu0
      %1170 = vmatprep.mubr.f32.mxu0 0.0
      %1171 = vmatmul.mubr.f32.gmra.mrb[0].mxu0 %v983
      %v1172 = vpop.f32.mrb[0].mxu0
      %v1173 = vadd.f32 %v925, %v1172
      %v1174 = vpop.f32.mrb[0].mxu0
      %1175 = vmatprep.mubr.f32.mxu0 0.0
      %1176 = vmatmul.mubr.f32.gmra.mrb[0].mxu0 %v986
      %v1177 = vpop.f32.mrb[0].mxu0
      %v1178 = vadd.f32 %v925, %v1177
      %v1179 = vpop.f32.mrb[0].mxu0
      %1180 = vmatprep.mubr.f32.mxu0 0.0
      %1181 = vmatmul.mubr.f32.gmra.mrb[0].mxu0 %v989
      %v1182 = vpop.f32.mrb[0].mxu0
      %v1183 = vadd.f32 %v925, %v1182
      %v1184 = vpop.f32.mrb[0].mxu0
      %1185 = vmatprep.mubr.f32.mxu0 0.0
      %1186 = vmatmul.mubr.f32.gmra.mrb[0].mxu0 %v992
      %v1187 = vpop.f32.mrb[0].mxu0
      %v1188 = vadd.f32 %v925, %v1187
      %v1189 = vpop.f32.mrb[0].mxu0
      %1190 = vmatprep.mubr.f32.mxu0 0.0
      %1191 = vmatmul.mubr.f32.gmra.mrb[0].mxu0 %v995
      %v1192 = vpop.f32.mrb[0].mxu0
      %v1193 = vadd.f32 %v925, %v1192
      %v1194 = vpop.f32.mrb[0].mxu0
      %1195 = vmatprep.mubr.f32.mxu0 0.0
      %1196 = vmatmul.mubr.f32.gmra.mrb[0].mxu0 %v998
      %v1197 = vpop.f32.mrb[0].mxu0
      %v1198 = vadd.f32 %v925, %v1197
      %v1199 = vpop.f32.mrb[0].mxu0
      %1200 = vmatprep.mubr.f32.mxu0 0.0
      %1201 = vmatmul.mubr.f32.gmra.mrb[0].mxu0 %v1001
      %v1202 = vpop.f32.mrb[0].mxu0
      %v1203 = vadd.f32 %v925, %v1202
      %v1204 = vpop.f32.mrb[0].mxu0
      %1205 = vmatprep.mubr.f32.mxu0 0.0
      %1206 = vmatmul.mubr.f32.gmra.mrb[0].mxu0 %v1004
      %v1207 = vpop.f32.mrb[0].mxu0
      %v1208 = vadd.f32 %v925, %v1207
      %v1209 = vpop.f32.mrb[0].mxu0
      %1210 = vmatprep.mubr.f32.mxu0 0.0
      %1211 = vmatmul.mubr.f32.gmra.mrb[0].mxu0 %v1007
      %v1212 = vpop.f32.mrb[0].mxu0
      %v1213 = vadd.f32 %v925, %v1212
      %v1214 = vpop.f32.mrb[0].mxu0
      %1215 = vmatprep.mubr.f32.mxu0 0.0
      %1216 = vmatmul.mubr.f32.gmra.mrb[0].mxu0 %v1010
      %v1217 = vpop.f32.mrb[0].mxu0
      %v1218 = vadd.f32 %v925, %v1217
      %v1219 = vpop.f32.mrb[0].mxu0
      %1220 = vdwg.mxu0
      %v1221 = vmax.f32 %v1083, 0.0
      %v1222 = vmax.f32 %v1088, 0.0
      %v1223 = vmax.f32 %v1093, 0.0
      %v1224 = vmax.f32 %v1098, 0.0
      %v1225 = vmax.f32 %v1103, 0.0
      %v1226 = vmax.f32 %v1108, 0.0
      %v1227 = vmax.f32 %v1113, 0.0
      %v1228 = vmax.f32 %v1118, 0.0
      %v1229 = vmax.f32 %v1123, 0.0
      %v1230 = vmax.f32 %v1128, 0.0
      %v1231 = vmax.f32 %v1133, 0.0
      %v1232 = vmax.f32 %v1138, 0.0
      %v1233 = vmax.f32 %v1143, 0.0
      %v1234 = vmax.f32 %v1148, 0.0
      %v1235 = vmax.f32 %v1153, 0.0
      %v1236 = vmax.f32 %v1158, 0.0
      %v1237 = vmax.f32 %v1163, 0.0
      %v1238 = vmax.f32 %v1168, 0.0
      %v1239 = vmax.f32 %v1173, 0.0
      %v1240 = vmax.f32 %v1178, 0.0
      %v1241 = vmax.f32 %v1183, 0.0
      %v1242 = vmax.f32 %v1188, 0.0
      %v1243 = vmax.f32 %v1193, 0.0
      %v1244 = vmax.f32 %v1198, 0.0
      %v1245 = vmax.f32 %v1203, 0.0
      %v1246 = vmax.f32 %v1208, 0.0
      %v1247 = vmax.f32 %v1213, 0.0
      %v1248 = vmax.f32 %v1218, 0.0
      %v1277 = vrot.slane %v1221, 1
      %v1278 = vrot.slane %v1222, 1
      %v1279 = vsel %vm289, %v1277, %v1278
      %v1280 = vrot.slane %v1223, 1
      %v1281 = vrot.slane %v1224, 1
      %v1282 = vsel %vm289, %v1280, %v1281
      %v1283 = vrot.slane %v1225, 1
      %v1284 = vrot.slane %v1226, 1
      %v1285 = vsel %vm289, %v1283, %v1284
      %v1286 = vrot.slane %v1227, 1
      %v1287 = vrot.slane %v1228, 1
      %v1288 = vsel %vm289, %v1286, %v1287
      %v1289 = vrot.slane %v1229, 1
      %v1290 = vrot.slane %v1230, 1
      %v1291 = vsel %vm289, %v1289, %v1290
      %v1292 = vrot.slane %v1231, 1
      %v1293 = vrot.slane %v1232, 1
      %v1294 = vsel %vm289, %v1292, %v1293
      %v1295 = vrot.slane %v1233, 1
      %v1296 = vrot.slane %v1234, 1
      %v1297 = vsel %vm289, %v1295, %v1296
      %v1298 = vrot.slane %v1235, 1
      %v1299 = vrot.slane %v1236, 1
      %v1300 = vsel %vm289, %v1298, %v1299
      %v1301 = vrot.slane %v1237, 1
      %v1302 = vrot.slane %v1238, 1
      %v1303 = vsel %vm289, %v1301, %v1302
      %v1304 = vrot.slane %v1239, 1
      %v1305 = vrot.slane %v1240, 1
      %v1306 = vsel %vm289, %v1304, %v1305
      %v1307 = vrot.slane %v1241, 1
      %v1308 = vrot.slane %v1242, 1
      %v1309 = vsel %vm289, %v1307, %v1308
      %v1310 = vrot.slane %v1243, 1
      %v1311 = vrot.slane %v1244, 1
      %v1312 = vsel %vm289, %v1310, %v1311
      %v1313 = vrot.slane %v1245, 1
      %v1314 = vrot.slane %v1246, 1
      %v1315 = vsel %vm289, %v1313, %v1314
      %v1316 = vrot.slane %v1247, 1
      %v1317 = vrot.slane %v1248, 1
      %v1318 = vsel %vm289, %v1316, %v1317
      %1319 = vrot.lane.b32.xlu0 %v1279, 8
      %v1320 = vpop.permute.xlu0 %1319
      %1321 = vrot.lane.b32.xlu0 %v1278, 8
      %v1322 = vpop.permute.xlu0 %1321
      %1323 = vrot.lane.b32.xlu0 %v1282, 8
      %v1324 = vpop.permute.xlu0 %1323
      %1325 = vrot.lane.b32.xlu0 %v1281, 8
      %v1326 = vpop.permute.xlu0 %1325
      %1327 = vrot.lane.b32.xlu0 %v1285, 8
      %v1328 = vpop.permute.xlu0 %1327
      %1329 = vrot.lane.b32.xlu0 %v1284, 8
      %v1330 = vpop.permute.xlu0 %1329
      %1331 = vrot.lane.b32.xlu0 %v1288, 8
      %v1332 = vpop.permute.xlu0 %1331
      %1333 = vrot.lane.b32.xlu0 %v1287, 8
      %v1334 = vpop.permute.xlu0 %1333
      %1335 = vrot.lane.b32.xlu0 %v1291, 8
      %v1336 = vpop.permute.xlu0 %1335
      %1337 = vrot.lane.b32.xlu0 %v1290, 8
      %v1338 = vpop.permute.xlu0 %1337
      %1339 = vrot.lane.b32.xlu0 %v1294, 8
      %v1340 = vpop.permute.xlu0 %1339
      %1341 = vrot.lane.b32.xlu0 %v1293, 8
      %v1342 = vpop.permute.xlu0 %1341
      %1343 = vrot.lane.b32.xlu0 %v1297, 8
      %v1344 = vpop.permute.xlu0 %1343
      %1345 = vrot.lane.b32.xlu0 %v1296, 8
      %v1346 = vpop.permute.xlu0 %1345
      %1347 = vrot.lane.b32.xlu0 %v1300, 8
      %v1348 = vpop.permute.xlu0 %1347
      %1349 = vrot.lane.b32.xlu0 %v1299, 8
      %v1350 = vpop.permute.xlu0 %1349
      %1351 = vrot.lane.b32.xlu0 %v1303, 8
      %v1352 = vpop.permute.xlu0 %1351
      %1353 = vrot.lane.b32.xlu0 %v1302, 8
      %v1354 = vpop.permute.xlu0 %1353
      %1355 = vrot.lane.b32.xlu0 %v1306, 8
      %v1356 = vpop.permute.xlu0 %1355
      %1357 = vrot.lane.b32.xlu0 %v1305, 8
      %v1358 = vpop.permute.xlu0 %1357
      %1359 = vrot.lane.b32.xlu0 %v1309, 8
      %v1360 = vpop.permute.xlu0 %1359
      %1361 = vrot.lane.b32.xlu0 %v1308, 8
      %v1362 = vpop.permute.xlu0 %1361
      %1363 = vrot.lane.b32.xlu0 %v1312, 8
      %v1364 = vpop.permute.xlu0 %1363
      %1365 = vrot.lane.b32.xlu0 %v1311, 8
      %v1366 = vpop.permute.xlu0 %1365
      %1367 = vrot.lane.b32.xlu0 %v1315, 8
      %v1368 = vpop.permute.xlu0 %1367
      %1369 = vrot.lane.b32.xlu0 %v1314, 8
      %v1370 = vpop.permute.xlu0 %1369
      %1371 = vrot.lane.b32.xlu0 %v1318, 8
      %v1372 = vpop.permute.xlu0 %1371
      %1373 = vrot.lane.b32.xlu0 %v1317, 8
      %v1374 = vpop.permute.xlu0 %1373
      %v1403 = vrot.slane %v1221, 2
      %v1404 = vrot.slane %v1222, 2
      %v1405 = vsel %vm434, %v1403, %v1404
      %v1406 = vrot.slane %v1223, 2
      %v1407 = vrot.slane %v1224, 2
      %v1408 = vsel %vm434, %v1406, %v1407
      %v1409 = vrot.slane %v1225, 2
      %v1410 = vrot.slane %v1226, 2
      %v1411 = vsel %vm434, %v1409, %v1410
      %v1412 = vrot.slane %v1227, 2
      %v1413 = vrot.slane %v1228, 2
      %v1414 = vsel %vm434, %v1412, %v1413
      %v1415 = vrot.slane %v1229, 2
      %v1416 = vrot.slane %v1230, 2
      %v1417 = vsel %vm434, %v1415, %v1416
      %v1418 = vrot.slane %v1231, 2
      %v1419 = vrot.slane %v1232, 2
      %v1420 = vsel %vm434, %v1418, %v1419
      %v1421 = vrot.slane %v1233, 2
      %v1422 = vrot.slane %v1234, 2
      %v1423 = vsel %vm434, %v1421, %v1422
      %v1424 = vrot.slane %v1235, 2
      %v1425 = vrot.slane %v1236, 2
      %v1426 = vsel %vm434, %v1424, %v1425
      %v1427 = vrot.slane %v1237, 2
      %v1428 = vrot.slane %v1238, 2
      %v1429 = vsel %vm434, %v1427, %v1428
      %v1430 = vrot.slane %v1239, 2
      %v1431 = vrot.slane %v1240, 2
      %v1432 = vsel %vm434, %v1430, %v1431
      %v1433 = vrot.slane %v1241, 2
      %v1434 = vrot.slane %v1242, 2
      %v1435 = vsel %vm434, %v1433, %v1434
      %v1436 = vrot.slane %v1243, 2
      %v1437 = vrot.slane %v1244, 2
      %v1438 = vsel %vm434, %v1436, %v1437
      %v1439 = vrot.slane %v1245, 2
      %v1440 = vrot.slane %v1246, 2
      %v1441 = vsel %vm434, %v1439, %v1440
      %v1442 = vrot.slane %v1247, 2
      %v1443 = vrot.slane %v1248, 2
      %v1444 = vsel %vm434, %v1442, %v1443
      %1445 = vrot.lane.b32.xlu0 %v1405, 16
      %v1446 = vpop.permute.xlu0 %1445
      %1447 = vrot.lane.b32.xlu0 %v1404, 16
      %v1448 = vpop.permute.xlu0 %1447
      %1449 = vrot.lane.b32.xlu0 %v1408, 16
      %v1450 = vpop.permute.xlu0 %1449
      %1451 = vrot.lane.b32.xlu0 %v1407, 16
      %v1452 = vpop.permute.xlu0 %1451
      %1453 = vrot.lane.b32.xlu0 %v1411, 16
      %v1454 = vpop.permute.xlu0 %1453
      %1455 = vrot.lane.b32.xlu0 %v1410, 16
      %v1456 = vpop.permute.xlu0 %1455
      %1457 = vrot.lane.b32.xlu0 %v1414, 16
      %v1458 = vpop.permute.xlu0 %1457
      %1459 = vrot.lane.b32.xlu0 %v1413, 16
      %v1460 = vpop.permute.xlu0 %1459
      %1461 = vrot.lane.b32.xlu0 %v1417, 16
      %v1462 = vpop.permute.xlu0 %1461
      %1463 = vrot.lane.b32.xlu0 %v1416, 16
      %v1464 = vpop.permute.xlu0 %1463
      %1465 = vrot.lane.b32.xlu0 %v1420, 16
      %v1466 = vpop.permute.xlu0 %1465
      %1467 = vrot.lane.b32.xlu0 %v1419, 16
      %v1468 = vpop.permute.xlu0 %1467
      %1469 = vrot.lane.b32.xlu0 %v1423, 16
      %v1470 = vpop.permute.xlu0 %1469
      %1471 = vrot.lane.b32.xlu0 %v1422, 16
      %v1472 = vpop.permute.xlu0 %1471
      %1473 = vrot.lane.b32.xlu0 %v1426, 16
      %v1474 = vpop.permute.xlu0 %1473
      %1475 = vrot.lane.b32.xlu0 %v1425, 16
      %v1476 = vpop.permute.xlu0 %1475
      %1477 = vrot.lane.b32.xlu0 %v1429, 16
      %v1478 = vpop.permute.xlu0 %1477
      %1479 = vrot.lane.b32.xlu0 %v1428, 16
      %v1480 = vpop.permute.xlu0 %1479
      %1481 = vrot.lane.b32.xlu0 %v1432, 16
      %v1482 = vpop.permute.xlu0 %1481
      %1483 = vrot.lane.b32.xlu0 %v1431, 16
      %v1484 = vpop.permute.xlu0 %1483
      %1485 = vrot.lane.b32.xlu0 %v1435, 16
      %v1486 = vpop.permute.xlu0 %1485
      %1487 = vrot.lane.b32.xlu0 %v1434, 16
      %v1488 = vpop.permute.xlu0 %1487
      %1489 = vrot.lane.b32.xlu0 %v1438, 16
      %v1490 = vpop.permute.xlu0 %1489
      %1491 = vrot.lane.b32.xlu0 %v1437, 16
      %v1492 = vpop.permute.xlu0 %1491
      %1493 = vrot.lane.b32.xlu0 %v1441, 16
      %v1494 = vpop.permute.xlu0 %1493
      %1495 = vrot.lane.b32.xlu0 %v1440, 16
      %v1496 = vpop.permute.xlu0 %1495
      %1497 = vrot.lane.b32.xlu0 %v1444, 16
      %v1498 = vpop.permute.xlu0 %1497
      %1499 = vrot.lane.b32.xlu0 %v1443, 16
      %v1500 = vpop.permute.xlu0 %1499
      %v1529 = vsel %vm612, %v1221, %v1320
      %v1530 = vsel %vm612, %v1222, %v1322
      %v1531 = vsel %vm612, %v1223, %v1324
      %v1532 = vsel %vm612, %v1224, %v1326
      %v1533 = vsel %vm612, %v1225, %v1328
      %v1534 = vsel %vm612, %v1226, %v1330
      %v1535 = vsel %vm612, %v1227, %v1332
      %v1536 = vsel %vm612, %v1228, %v1334
      %v1537 = vsel %vm612, %v1229, %v1336
      %v1538 = vsel %vm612, %v1230, %v1338
      %v1539 = vsel %vm612, %v1231, %v1340
      %v1540 = vsel %vm612, %v1232, %v1342
      %v1541 = vsel %vm612, %v1233, %v1344
      %v1542 = vsel %vm612, %v1234, %v1346
      %v1543 = vsel %vm612, %v1235, %v1348
      %v1544 = vsel %vm612, %v1236, %v1350
      %v1545 = vsel %vm612, %v1237, %v1352
      %v1546 = vsel %vm612, %v1238, %v1354
      %v1547 = vsel %vm612, %v1239, %v1356
      %v1548 = vsel %vm612, %v1240, %v1358
      %v1549 = vsel %vm612, %v1241, %v1360
      %v1550 = vsel %vm612, %v1242, %v1362
      %v1551 = vsel %vm612, %v1243, %v1364
      %v1552 = vsel %vm612, %v1244, %v1366
      %v1553 = vsel %vm612, %v1245, %v1368
      %v1554 = vsel %vm612, %v1246, %v1370
      %v1555 = vsel %vm612, %v1247, %v1372
      %v1556 = vsel %vm612, %v1248, %v1374
      %vm1557 = vcmask 130048
      %v1558 = vsel %vm1557, %v1529, %v1446
      %v1559 = vsel %vm1557, %v1530, %v1448
      %v1560 = vsel %vm1557, %v1531, %v1450
      %v1561 = vsel %vm1557, %v1532, %v1452
      %v1562 = vsel %vm1557, %v1533, %v1454
      %v1563 = vsel %vm1557, %v1534, %v1456
      %v1564 = vsel %vm1557, %v1535, %v1458
      %v1565 = vsel %vm1557, %v1536, %v1460
      %v1566 = vsel %vm1557, %v1537, %v1462
      %v1567 = vsel %vm1557, %v1538, %v1464
      %v1568 = vsel %vm1557, %v1539, %v1466
      %v1569 = vsel %vm1557, %v1540, %v1468
      %v1570 = vsel %vm1557, %v1541, %v1470
      %v1571 = vsel %vm1557, %v1542, %v1472
      %v1572 = vsel %vm1557, %v1543, %v1474
      %v1573 = vsel %vm1557, %v1544, %v1476
      %v1574 = vsel %vm1557, %v1545, %v1478
      %v1575 = vsel %vm1557, %v1546, %v1480
      %v1576 = vsel %vm1557, %v1547, %v1482
      %v1577 = vsel %vm1557, %v1548, %v1484
      %v1578 = vsel %vm1557, %v1549, %v1486
      %v1579 = vsel %vm1557, %v1550, %v1488
      %v1580 = vsel %vm1557, %v1551, %v1490
      %v1581 = vsel %vm1557, %v1552, %v1492
      %v1582 = vsel %vm1557, %v1553, %v1494
      %v1583 = vsel %vm1557, %v1554, %v1496
      %v1584 = vsel %vm1557, %v1555, %v1498
      %v1585 = vsel %vm1557, %v1556, %v1500
      %1610 = vrot.lane.b32.xlu0 %v1560, 24
      %v1611 = vpop.permute.xlu0 %1610
      %1612 = vrot.lane.b32.xlu0 %v1561, 24
      %v1613 = vpop.permute.xlu0 %1612
      %1614 = vrot.lane.b32.xlu0 %v1562, 24
      %v1615 = vpop.permute.xlu0 %1614
      %1616 = vrot.lane.b32.xlu0 %v1563, 24
      %v1617 = vpop.permute.xlu0 %1616
      %1618 = vrot.lane.b32.xlu0 %v1564, 24
      %v1619 = vpop.permute.xlu0 %1618
      %1620 = vrot.lane.b32.xlu0 %v1565, 24
      %v1621 = vpop.permute.xlu0 %1620
      %1622 = vrot.lane.b32.xlu0 %v1566, 24
      %v1623 = vpop.permute.xlu0 %1622
      %1624 = vrot.lane.b32.xlu0 %v1567, 24
      %v1625 = vpop.permute.xlu0 %1624
      %1626 = vrot.lane.b32.xlu0 %v1568, 24
      %v1627 = vpop.permute.xlu0 %1626
      %1628 = vrot.lane.b32.xlu0 %v1569, 24
      %v1629 = vpop.permute.xlu0 %1628
      %1630 = vrot.lane.b32.xlu0 %v1570, 24
      %v1631 = vpop.permute.xlu0 %1630
      %1632 = vrot.lane.b32.xlu0 %v1571, 24
      %v1633 = vpop.permute.xlu0 %1632
      %1634 = vrot.lane.b32.xlu0 %v1572, 24
      %v1635 = vpop.permute.xlu0 %1634
      %1636 = vrot.lane.b32.xlu0 %v1573, 24
      %v1637 = vpop.permute.xlu0 %1636
      %1638 = vrot.lane.b32.xlu0 %v1574, 24
      %v1639 = vpop.permute.xlu0 %1638
      %1640 = vrot.lane.b32.xlu0 %v1575, 24
      %v1641 = vpop.permute.xlu0 %1640
      %1642 = vrot.lane.b32.xlu0 %v1576, 24
      %v1643 = vpop.permute.xlu0 %1642
      %1644 = vrot.lane.b32.xlu0 %v1577, 24
      %v1645 = vpop.permute.xlu0 %1644
      %1646 = vrot.lane.b32.xlu0 %v1578, 24
      %v1647 = vpop.permute.xlu0 %1646
      %1648 = vrot.lane.b32.xlu0 %v1579, 24
      %v1649 = vpop.permute.xlu0 %1648
      %1650 = vrot.lane.b32.xlu0 %v1580, 24
      %v1651 = vpop.permute.xlu0 %1650
      %1652 = vrot.lane.b32.xlu0 %v1581, 24
      %v1653 = vpop.permute.xlu0 %1652
      %1654 = vrot.lane.b32.xlu0 %v1582, 24
      %v1655 = vpop.permute.xlu0 %1654
      %1656 = vrot.lane.b32.xlu0 %v1583, 24
      %v1657 = vpop.permute.xlu0 %1656
      %1684 = vrot.lane.b32.xlu0 %v1562, 48
      %v1685 = vpop.permute.xlu0 %1684
      %1686 = vrot.lane.b32.xlu0 %v1563, 48
      %v1687 = vpop.permute.xlu0 %1686
      %1688 = vrot.lane.b32.xlu0 %v1564, 48
      %v1689 = vpop.permute.xlu0 %1688
      %1690 = vrot.lane.b32.xlu0 %v1565, 48
      %v1691 = vpop.permute.xlu0 %1690
      %1692 = vrot.lane.b32.xlu0 %v1566, 48
      %v1693 = vpop.permute.xlu0 %1692
      %1694 = vrot.lane.b32.xlu0 %v1567, 48
      %v1695 = vpop.permute.xlu0 %1694
      %1696 = vrot.lane.b32.xlu0 %v1568, 48
      %v1697 = vpop.permute.xlu0 %1696
      %1698 = vrot.lane.b32.xlu0 %v1569, 48
      %v1699 = vpop.permute.xlu0 %1698
      %1700 = vrot.lane.b32.xlu0 %v1570, 48
      %v1701 = vpop.permute.xlu0 %1700
      %1702 = vrot.lane.b32.xlu0 %v1571, 48
      %v1703 = vpop.permute.xlu0 %1702
      %1704 = vrot.lane.b32.xlu0 %v1572, 48
      %v1705 = vpop.permute.xlu0 %1704
      %1706 = vrot.lane.b32.xlu0 %v1573, 48
      %v1707 = vpop.permute.xlu0 %1706
      %1708 = vrot.lane.b32.xlu0 %v1574, 48
      %v1709 = vpop.permute.xlu0 %1708
      %1710 = vrot.lane.b32.xlu0 %v1575, 48
      %v1711 = vpop.permute.xlu0 %1710
      %1712 = vrot.lane.b32.xlu0 %v1576, 48
      %v1713 = vpop.permute.xlu0 %1712
      %1714 = vrot.lane.b32.xlu0 %v1577, 48
      %v1715 = vpop.permute.xlu0 %1714
      %1716 = vrot.lane.b32.xlu0 %v1578, 48
      %v1717 = vpop.permute.xlu0 %1716
      %1718 = vrot.lane.b32.xlu0 %v1579, 48
      %v1719 = vpop.permute.xlu0 %1718
      %1720 = vrot.lane.b32.xlu0 %v1580, 48
      %v1721 = vpop.permute.xlu0 %1720
      %1722 = vrot.lane.b32.xlu0 %v1581, 48
      %v1723 = vpop.permute.xlu0 %1722
      %1724 = vrot.lane.b32.xlu0 %v1582, 48
      %v1725 = vpop.permute.xlu0 %1724
      %1726 = vrot.lane.b32.xlu0 %v1583, 48
      %v1727 = vpop.permute.xlu0 %1726
      %1728 = vrot.lane.b32.xlu0 %v1584, 48
      %v1729 = vpop.permute.xlu0 %1728
      %1730 = vrot.lane.b32.xlu0 %v1585, 48
      %v1731 = vpop.permute.xlu0 %1730
      %v1756 = vsel %vm872, %v1558, %v1611
      %v1757 = vsel %vm872, %v1559, %v1613
      %v1758 = vsel %vm872, %v1560, %v1615
      %v1759 = vsel %vm872, %v1561, %v1617
      %v1760 = vsel %vm872, %v1562, %v1619
      %v1761 = vsel %vm872, %v1563, %v1621
      %v1762 = vsel %vm872, %v1564, %v1623
      %v1763 = vsel %vm872, %v1565, %v1625
      %v1764 = vsel %vm872, %v1566, %v1627
      %v1765 = vsel %vm872, %v1567, %v1629
      %v1766 = vsel %vm872, %v1568, %v1631
      %v1767 = vsel %vm872, %v1569, %v1633
      %v1768 = vsel %vm872, %v1570, %v1635
      %v1769 = vsel %vm872, %v1571, %v1637
      %v1770 = vsel %vm872, %v1572, %v1639
      %v1771 = vsel %vm872, %v1573, %v1641
      %v1772 = vsel %vm872, %v1574, %v1643
      %v1773 = vsel %vm872, %v1575, %v1645
      %v1774 = vsel %vm872, %v1576, %v1647
      %v1775 = vsel %vm872, %v1577, %v1649
      %v1776 = vsel %vm872, %v1578, %v1651
      %v1777 = vsel %vm872, %v1579, %v1653
      %v1778 = vsel %vm872, %v1580, %v1655
      %v1779 = vsel %vm872, %v1581, %v1657
      %vm1780 = vcmask 392192
      %v1781 = vsel %vm1780, %v1756, %v1685
      %v1782 = vsel %vm1780, %v1757, %v1687
      %v1783 = vsel %vm1780, %v1758, %v1689
      %v1784 = vsel %vm1780, %v1759, %v1691
      %v1785 = vsel %vm1780, %v1760, %v1693
      %v1786 = vsel %vm1780, %v1761, %v1695
      %v1787 = vsel %vm1780, %v1762, %v1697
      %v1788 = vsel %vm1780, %v1763, %v1699
      %v1789 = vsel %vm1780, %v1764, %v1701
      %v1790 = vsel %vm1780, %v1765, %v1703
      %v1791 = vsel %vm1780, %v1766, %v1705
      %v1792 = vsel %vm1780, %v1767, %v1707
      %v1793 = vsel %vm1780, %v1768, %v1709
      %v1794 = vsel %vm1780, %v1769, %v1711
      %v1795 = vsel %vm1780, %v1770, %v1713
      %v1796 = vsel %vm1780, %v1771, %v1715
      %v1797 = vsel %vm1780, %v1772, %v1717
      %v1798 = vsel %vm1780, %v1773, %v1719
      %v1799 = vsel %vm1780, %v1774, %v1721
      %v1800 = vsel %vm1780, %v1775, %v1723
      %v1801 = vsel %vm1780, %v1776, %v1725
      %v1802 = vsel %vm1780, %v1777, %v1727
      %v1803 = vsel %vm1780, %v1778, %v1729
      %v1804 = vsel %vm1780, %v1779, %v1731
      %v1805 = vsel %vm1012, %v1782, 0.0
      %v1806 = vsel %vm1012, %v1784, 0.0
      %v1807 = vsel %vm1012, %v1786, 0.0
      %v1808 = vsel %vm1012, %v1788, 0.0
      %v1809 = vsel %vm1012, %v1790, 0.0
      %v1810 = vsel %vm1012, %v1792, 0.0
      %v1811 = vsel %vm1012, %v1794, 0.0
      %v1812 = vsel %vm1012, %v1796, 0.0
      %v1813 = vsel %vm1012, %v1798, 0.0
      %v1814 = vsel %vm1012, %v1800, 0.0
      %v1815 = vsel %vm1012, %v1802, 0.0
      %v1816 = vsel %vm1012, %v1804, 0.0
      %v1817 = vld [vmem:[%s3] sm:$0xff]
      %v1818 = vld [vmem:[%s3 + $0x8] sm:$0xff]
      %v1819 = vld [vmem:[%s3 + $0x10] sm:$0xff]
      %v1820 = vld [vmem:[%s3 + $0x18] sm:$0xff]
      %v1821 = vld [vmem:[%s3 + $0x20] sm:$0xff]
      %v1822 = vld [vmem:[%s3 + $0x28] sm:$0xff]
      %v1823 = vld [vmem:[%s3 + $0x30] sm:$0xff]
      %v1824 = vld [vmem:[%s3 + $0x38] sm:$0xff]
      %v1825 = vld [vmem:[%s3 + $0x40] sm:$0xff]
      %v1826 = vld [vmem:[%s4] sm:$0x1]
      %v1828 = vlaneseq
      %v1829 = vshrl.u32 %v1828, 7
      %v1830 = vsub.s32 0, %v1829
      %v1831 = vrot.slane %v1826, %v1830
      %vm1833 = vcmask 588800
      %v1835 = vsel %vm1833, %v1781, 0
      %v1838 = vsel %vm1833, %v1805, 0
      %v1841 = vsel %vm1833, %v1783, 0
      %v1844 = vsel %vm1833, %v1806, 0
      %v1847 = vsel %vm1833, %v1785, 0
      %v1850 = vsel %vm1833, %v1807, 0
      %v1853 = vsel %vm1833, %v1787, 0
      %v1856 = vsel %vm1833, %v1808, 0
      %v1859 = vsel %vm1833, %v1789, 0
      %v1862 = vsel %vm1833, %v1809, 0
      %v1865 = vsel %vm1833, %v1791, 0
      %v1868 = vsel %vm1833, %v1810, 0
      %v1871 = vsel %vm1833, %v1793, 0
      %v1874 = vsel %vm1833, %v1811, 0
      %v1877 = vsel %vm1833, %v1795, 0
      %v1880 = vsel %vm1833, %v1812, 0
      %v1883 = vsel %vm1833, %v1797, 0
      %v1886 = vsel %vm1833, %v1813, 0
      %v1889 = vsel %vm1833, %v1799, 0
      %v1892 = vsel %vm1833, %v1814, 0
      %v1895 = vsel %vm1833, %v1801, 0
      %v1898 = vsel %vm1833, %v1815, 0
      %v1901 = vsel %vm1833, %v1803, 0
      %v1904 = vsel %vm1833, %v1816, 0
      %1906 = vmatprep.subr.mxu0 0.0
      %1907 = vmatpush1.msra.mxu0 %v1817
      %1908 = vmatprep.subr.mxu0 0.0
      %1909 = vmatpush1.msra.mxu0 %v1818
      %1910 = vmatprep.subr.mxu0 0.0
      %1911 = vmatpush1.msra.mxu0 %v1819
      %1912 = vmatprep.subr.mxu0 0.0
      %1913 = vmatpush1.msra.mxu0 %v1820
      %1914 = vmatprep.subr.mxu0 0.0
      %1915 = vmatpush1.msra.mxu0 %v1821
      %1916 = vmatprep.subr.mxu0 0.0
      %1917 = vmatpush1.msra.mxu0 %v1822
      %1918 = vmatprep.subr.mxu0 0.0
      %1919 = vmatpush1.msra.mxu0 %v1823
      %1920 = vmatprep.subr.mxu0 0.0
      %1921 = vmatpush1.msra.mxu0 %v1824
      %1922 = vmatprep.subr.mxu0 0.0
      %1923 = vmatpush1.msra.mxu0 %v1825
      %1924 = vmatprep.subr.mxu0 0.0
      %1925 = vmatpush1.msra.mxu0 0.0
      %1926 = vmatprep.subr.mxu0 0.0
      %1927 = vmatpush1.msra.mxu0 0.0
      %1928 = vmatprep.subr.mxu0 0.0
      %1929 = vmatpush1.msra.mxu0 0.0
      %1930 = vmatprep.subr.mxu0 0.0
      %1931 = vmatpush1.msra.mxu0 0.0
      %1932 = vmatprep.subr.mxu0 0.0
      %1933 = vmatpush1.msra.mxu0 0.0
      %1934 = vmatprep.subr.mxu0 0.0
      %1935 = vmatpush1.msra.mxu0 0.0
      %1936 = vmatprep.subr.mxu0 0.0
      %1937 = vmatpush1.msra.mxu0 0.0
      %1938 = vmatprep.subr.mxu0 0.0
      %1939 = vmatpush1.msra.mxu0 0.0
      %1940 = vmatprep.subr.mxu0 0.0
      %1941 = vmatpush1.msra.mxu0 0.0
      %1942 = vmatprep.subr.mxu0 0.0
      %1943 = vmatpush1.msra.mxu0 0.0
      %1944 = vmatprep.subr.mxu0 0.0
      %1945 = vmatpush1.msra.mxu0 0.0
      %1946 = vmatprep.subr.mxu0 0.0
      %1947 = vmatpush1.msra.mxu0 0.0
      %1948 = vmatprep.subr.mxu0 0.0
      %1949 = vmatpush1.msra.mxu0 0.0
      %1950 = vmatprep.subr.mxu0 0.0
      %1951 = vmatpush1.msra.mxu0 0.0
      %1952 = vmatprep.subr.mxu0 0.0
      %1953 = vmatpush1.msra.mxu0 0.0
      %1954 = vmatprep.subr.mxu0 0.0
      %1955 = vmatpush1.msra.mxu0 0.0
      %1956 = vmatprep.subr.mxu0 0.0
      %1957 = vmatpush1.msra.mxu0 0.0
      %1958 = vmatprep.subr.mxu0 0.0
      %1959 = vmatpush1.msra.mxu0 0.0
      %1960 = vmatprep.subr.mxu0 0.0
      %1961 = vmatpush1.msra.mxu0 0.0
      %1962 = vmatprep.subr.mxu0 0.0
      %1963 = vmatpush1.msra.mxu0 0.0
      %1964 = vmatprep.subr.mxu0 0.0
      %1965 = vmatpush1.msra.mxu0 0.0
      %1966 = vmatprep.subr.mxu0 0.0
      %1967 = vmatpush1.msra.mxu0 0.0
      %1968 = vmatprep.subr.mxu0 0.0
      %1969 = vmatpush1.msra.mxu0 0.0
      %1970 = vmatprep.mubr.f32.mxu0 0.0
      %1971 = vmatmul.mubr.f32.gmra.mrb[0].mxu0 %v1835
      %v1972 = vpop.f32.mrb[0].mxu0
      %v1973 = vadd.f32 %v1831, %v1972
      %v1974 = vpop.f32.mrb[0].mxu0
      %1975 = vmatprep.mubr.f32.mxu0 0.0
      %1976 = vmatmul.mubr.f32.gmra.mrb[0].mxu0 %v1838
      %v1977 = vpop.f32.mrb[0].mxu0
      %v1978 = vadd.f32 %v1831, %v1977
      %v1979 = vpop.f32.mrb[0].mxu0
      %1980 = vmatprep.mubr.f32.mxu0 0.0
      %1981 = vmatmul.mubr.f32.gmra.mrb[0].mxu0 %v1841
      %v1982 = vpop.f32.mrb[0].mxu0
      %v1983 = vadd.f32 %v1831, %v1982
      %v1984 = vpop.f32.mrb[0].mxu0
      %1985 = vmatprep.mubr.f32.mxu0 0.0
      %1986 = vmatmul.mubr.f32.gmra.mrb[0].mxu0 %v1844
      %v1987 = vpop.f32.mrb[0].mxu0
      %v1988 = vadd.f32 %v1831, %v1987
      %v1989 = vpop.f32.mrb[0].mxu0
      %1990 = vmatprep.mubr.f32.mxu0 0.0
      %1991 = vmatmul.mubr.f32.gmra.mrb[0].mxu0 %v1847
      %v1992 = vpop.f32.mrb[0].mxu0
      %v1993 = vadd.f32 %v1831, %v1992
      %v1994 = vpop.f32.mrb[0].mxu0
      %1995 = vmatprep.mubr.f32.mxu0 0.0
      %1996 = vmatmul.mubr.f32.gmra.mrb[0].mxu0 %v1850
      %v1997 = vpop.f32.mrb[0].mxu0
      %v1998 = vadd.f32 %v1831, %v1997
      %v1999 = vpop.f32.mrb[0].mxu0
      %2000 = vmatprep.mubr.f32.mxu0 0.0
      %2001 = vmatmul.mubr.f32.gmra.mrb[0].mxu0 %v1853
      %v2002 = vpop.f32.mrb[0].mxu0
      %v2003 = vadd.f32 %v1831, %v2002
      %v2004 = vpop.f32.mrb[0].mxu0
      %2005 = vmatprep.mubr.f32.mxu0 0.0
      %2006 = vmatmul.mubr.f32.gmra.mrb[0].mxu0 %v1856
      %v2007 = vpop.f32.mrb[0].mxu0
      %v2008 = vadd.f32 %v1831, %v2007
      %v2009 = vpop.f32.mrb[0].mxu0
      %2010 = vmatprep.mubr.f32.mxu0 0.0
      %2011 = vmatmul.mubr.f32.gmra.mrb[0].mxu0 %v1859
      %v2012 = vpop.f32.mrb[0].mxu0
      %v2013 = vadd.f32 %v1831, %v2012
      %v2014 = vpop.f32.mrb[0].mxu0
      %2015 = vmatprep.mubr.f32.mxu0 0.0
      %2016 = vmatmul.mubr.f32.gmra.mrb[0].mxu0 %v1862
      %v2017 = vpop.f32.mrb[0].mxu0
      %v2018 = vadd.f32 %v1831, %v2017
      %v2019 = vpop.f32.mrb[0].mxu0
      %2020 = vmatprep.mubr.f32.mxu0 0.0
      %2021 = vmatmul.mubr.f32.gmra.mrb[0].mxu0 %v1865
      %v2022 = vpop.f32.mrb[0].mxu0
      %v2023 = vadd.f32 %v1831, %v2022
      %v2024 = vpop.f32.mrb[0].mxu0
      %2025 = vmatprep.mubr.f32.mxu0 0.0
      %2026 = vmatmul.mubr.f32.gmra.mrb[0].mxu0 %v1868
      %v2027 = vpop.f32.mrb[0].mxu0
      %v2028 = vadd.f32 %v1831, %v2027
      %v2029 = vpop.f32.mrb[0].mxu0
      %2030 = vmatprep.mubr.f32.mxu0 0.0
      %2031 = vmatmul.mubr.f32.gmra.mrb[0].mxu0 %v1871
      %v2032 = vpop.f32.mrb[0].mxu0
      %v2033 = vadd.f32 %v1831, %v2032
      %v2034 = vpop.f32.mrb[0].mxu0
      %2035 = vmatprep.mubr.f32.mxu0 0.0
      %2036 = vmatmul.mubr.f32.gmra.mrb[0].mxu0 %v1874
      %v2037 = vpop.f32.mrb[0].mxu0
      %v2038 = vadd.f32 %v1831, %v2037
      %v2039 = vpop.f32.mrb[0].mxu0
      %2040 = vmatprep.mubr.f32.mxu0 0.0
      %2041 = vmatmul.mubr.f32.gmra.mrb[0].mxu0 %v1877
      %v2042 = vpop.f32.mrb[0].mxu0
      %v2043 = vadd.f32 %v1831, %v2042
      %v2044 = vpop.f32.mrb[0].mxu0
      %2045 = vmatprep.mubr.f32.mxu0 0.0
      %2046 = vmatmul.mubr.f32.gmra.mrb[0].mxu0 %v1880
      %v2047 = vpop.f32.mrb[0].mxu0
      %v2048 = vadd.f32 %v1831, %v2047
      %v2049 = vpop.f32.mrb[0].mxu0
      %2050 = vmatprep.mubr.f32.mxu0 0.0
      %2051 = vmatmul.mubr.f32.gmra.mrb[0].mxu0 %v1883
      %v2052 = vpop.f32.mrb[0].mxu0
      %v2053 = vadd.f32 %v1831, %v2052
      %v2054 = vpop.f32.mrb[0].mxu0
      %2055 = vmatprep.mubr.f32.mxu0 0.0
      %2056 = vmatmul.mubr.f32.gmra.mrb[0].mxu0 %v1886
      %v2057 = vpop.f32.mrb[0].mxu0
      %v2058 = vadd.f32 %v1831, %v2057
      %v2059 = vpop.f32.mrb[0].mxu0
      %2060 = vmatprep.mubr.f32.mxu0 0.0
      %2061 = vmatmul.mubr.f32.gmra.mrb[0].mxu0 %v1889
      %v2062 = vpop.f32.mrb[0].mxu0
      %v2063 = vadd.f32 %v1831, %v2062
      %v2064 = vpop.f32.mrb[0].mxu0
      %2065 = vmatprep.mubr.f32.mxu0 0.0
      %2066 = vmatmul.mubr.f32.gmra.mrb[0].mxu0 %v1892
      %v2067 = vpop.f32.mrb[0].mxu0
      %v2068 = vadd.f32 %v1831, %v2067
      %v2069 = vpop.f32.mrb[0].mxu0
      %2070 = vmatprep.mubr.f32.mxu0 0.0
      %2071 = vmatmul.mubr.f32.gmra.mrb[0].mxu0 %v1895
      %v2072 = vpop.f32.mrb[0].mxu0
      %v2073 = vadd.f32 %v1831, %v2072
      %v2074 = vpop.f32.mrb[0].mxu0
      %2075 = vmatprep.mubr.f32.mxu0 0.0
      %2076 = vmatmul.mubr.f32.gmra.mrb[0].mxu0 %v1898
      %v2077 = vpop.f32.mrb[0].mxu0
      %v2078 = vadd.f32 %v1831, %v2077
      %v2079 = vpop.f32.mrb[0].mxu0
      %2080 = vmatprep.mubr.f32.mxu0 0.0
      %2081 = vmatmul.mubr.f32.gmra.mrb[0].mxu0 %v1901
      %v2082 = vpop.f32.mrb[0].mxu0
      %v2083 = vadd.f32 %v1831, %v2082
      %v2084 = vpop.f32.mrb[0].mxu0
      %2085 = vmatprep.mubr.f32.mxu0 0.0
      %2086 = vmatmul.mubr.f32.gmra.mrb[0].mxu0 %v1904
      %v2087 = vpop.f32.mrb[0].mxu0
      %v2088 = vadd.f32 %v1831, %v2087
      %v2089 = vpop.f32.mrb[0].mxu0
      %2090 = vdwg.mxu0
      %v2091 = vmax.f32 %v1973, 0.0
      %v2092 = vmax.f32 %v1978, 0.0
      %v2093 = vmax.f32 %v1983, 0.0
      %v2094 = vmax.f32 %v1988, 0.0
      %v2095 = vmax.f32 %v1993, 0.0
      %v2096 = vmax.f32 %v1998, 0.0
      %v2097 = vmax.f32 %v2003, 0.0
      %v2098 = vmax.f32 %v2008, 0.0
      %v2099 = vmax.f32 %v2013, 0.0
      %v2100 = vmax.f32 %v2018, 0.0
      %v2101 = vmax.f32 %v2023, 0.0
      %v2102 = vmax.f32 %v2028, 0.0
      %v2103 = vmax.f32 %v2033, 0.0
      %v2104 = vmax.f32 %v2038, 0.0
      %v2105 = vmax.f32 %v2043, 0.0
      %v2106 = vmax.f32 %v2048, 0.0
      %v2107 = vmax.f32 %v2053, 0.0
      %v2108 = vmax.f32 %v2058, 0.0
      %v2109 = vmax.f32 %v2063, 0.0
      %v2110 = vmax.f32 %v2068, 0.0
      %v2111 = vmax.f32 %v2073, 0.0
      %v2112 = vmax.f32 %v2078, 0.0
      %v2113 = vmax.f32 %v2083, 0.0
      %v2114 = vmax.f32 %v2088, 0.0
      %v2115 = vmax.f32 %v2091, %v2093
      %v2116 = vmax.f32 %v2092, %v2094
      %v2117 = vmax.f32 %v2095, %v2097
      %v2118 = vmax.f32 %v2096, %v2098
      %v2119 = vmax.f32 %v2099, %v2101
      %v2120 = vmax.f32 %v2100, %v2102
      %v2121 = vmax.f32 %v2103, %v2105
      %v2122 = vmax.f32 %v2104, %v2106
      %v2123 = vmax.f32 %v2107, %v2109
      %v2124 = vmax.f32 %v2108, %v2110
      %v2125 = vmax.f32 %v2111, %v2113
      %v2126 = vmax.f32 %v2112, %v2114
      %v2139 = vcombine.high %v2115, %v2115
      %v2141 = vunpack.c.l.s4 1983009808
      %v2142 = vunpack.c.0.s8 %v2141
      %v2143 = vlaneseq
      %v2144 = vshrl.u32 %v2143, 7
      %v2145 = vsub.s32 %v2142, %v2144
      %v2146 = vrot.slane %v2115, %v2145
      %v2148 = vunpack.c.l.s4 1983009808
      %v2149 = vunpack.c.0.s8 %v2148
      %v2150 = vlaneseq
      %v2151 = vshrl.u32 %v2150, 7
      %v2152 = vsub.s32 %v2149, %v2151
      %v2153 = vrot.slane %v2139, %v2152
      %v2154 = vcombine.high %v2146, %v2146
      %v2155 = vcombine.high %v2153, %v2153
      %v2157 = vunpack.c.l.s4 1983009808
      %v2158 = vunpack.c.0.s8 %v2157
      %v2159 = vlaneseq
      %v2160 = vshrl.u32 %v2159, 7
      %v2161 = vsub.s32 %v2158, %v2160
      %v2162 = vrot.slane %v2116, %v2161
      %v2163 = vcombine.high %v2162, %v2162
      %v2164 = vcombine.high %v2117, %v2117
      %v2166 = vunpack.c.l.s4 1983009808
      %v2167 = vunpack.c.0.s8 %v2166
      %v2168 = vlaneseq
      %v2169 = vshrl.u32 %v2168, 7
      %v2170 = vsub.s32 %v2167, %v2169
      %v2171 = vrot.slane %v2117, %v2170
      %v2173 = vunpack.c.l.s4 1983009808
      %v2174 = vunpack.c.0.s8 %v2173
      %v2175 = vlaneseq
      %v2176 = vshrl.u32 %v2175, 7
      %v2177 = vsub.s32 %v2174, %v2176
      %v2178 = vrot.slane %v2164, %v2177
      %v2179 = vcombine.high %v2171, %v2171
      %v2180 = vcombine.high %v2178, %v2178
      %v2182 = vunpack.c.l.s4 1983009808
      %v2183 = vunpack.c.0.s8 %v2182
      %v2184 = vlaneseq
      %v2185 = vshrl.u32 %v2184, 7
      %v2186 = vsub.s32 %v2183, %v2185
      %v2187 = vrot.slane %v2118, %v2186
      %v2188 = vcombine.high %v2187, %v2187
      %v2189 = vcombine.high %v2119, %v2119
      %v2191 = vunpack.c.l.s4 1983009808
      %v2192 = vunpack.c.0.s8 %v2191
      %v2193 = vlaneseq
      %v2194 = vshrl.u32 %v2193, 7
      %v2195 = vsub.s32 %v2192, %v2194
      %v2196 = vrot.slane %v2119, %v2195
      %v2198 = vunpack.c.l.s4 1983009808
      %v2199 = vunpack.c.0.s8 %v2198
      %v2200 = vlaneseq
      %v2201 = vshrl.u32 %v2200, 7
      %v2202 = vsub.s32 %v2199, %v2201
      %v2203 = vrot.slane %v2189, %v2202
      %v2204 = vcombine.high %v2196, %v2196
      %v2205 = vcombine.high %v2203, %v2203
      %v2207 = vunpack.c.l.s4 1983009808
      %v2208 = vunpack.c.0.s8 %v2207
      %v2209 = vlaneseq
      %v2210 = vshrl.u32 %v2209, 7
      %v2211 = vsub.s32 %v2208, %v2210
      %v2212 = vrot.slane %v2120, %v2211
      %v2213 = vcombine.high %v2212, %v2212
      %v2214 = vcombine.high %v2121, %v2121
      %v2216 = vunpack.c.l.s4 1983009808
      %v2217 = vunpack.c.0.s8 %v2216
      %v2218 = vlaneseq
      %v2219 = vshrl.u32 %v2218, 7
      %v2220 = vsub.s32 %v2217, %v2219
      %v2221 = vrot.slane %v2121, %v2220
      %v2223 = vunpack.c.l.s4 1983009808
      %v2224 = vunpack.c.0.s8 %v2223
      %v2225 = vlaneseq
      %v2226 = vshrl.u32 %v2225, 7
      %v2227 = vsub.s32 %v2224, %v2226
      %v2228 = vrot.slane %v2214, %v2227
      %v2229 = vcombine.high %v2221, %v2221
      %v2230 = vcombine.high %v2228, %v2228
      %v2232 = vunpack.c.l.s4 1983009808
      %v2233 = vunpack.c.0.s8 %v2232
      %v2234 = vlaneseq
      %v2235 = vshrl.u32 %v2234, 7
      %v2236 = vsub.s32 %v2233, %v2235
      %v2237 = vrot.slane %v2122, %v2236
      %v2238 = vcombine.high %v2237, %v2237
      %v2239 = vcombine.high %v2123, %v2123
      %v2241 = vunpack.c.l.s4 1983009808
      %v2242 = vunpack.c.0.s8 %v2241
      %v2243 = vlaneseq
      %v2244 = vshrl.u32 %v2243, 7
      %v2245 = vsub.s32 %v2242, %v2244
      %v2246 = vrot.slane %v2123, %v2245
      %v2248 = vunpack.c.l.s4 1983009808
      %v2249 = vunpack.c.0.s8 %v2248
      %v2250 = vlaneseq
      %v2251 = vshrl.u32 %v2250, 7
      %v2252 = vsub.s32 %v2249, %v2251
      %v2253 = vrot.slane %v2239, %v2252
      %v2254 = vcombine.high %v2246, %v2246
      %v2255 = vcombine.high %v2253, %v2253
      %v2257 = vunpack.c.l.s4 1983009808
      %v2258 = vunpack.c.0.s8 %v2257
      %v2259 = vlaneseq
      %v2260 = vshrl.u32 %v2259, 7
      %v2261 = vsub.s32 %v2258, %v2260
      %v2262 = vrot.slane %v2124, %v2261
      %v2263 = vcombine.high %v2262, %v2262
      %v2264 = vcombine.high %v2125, %v2125
      %v2266 = vunpack.c.l.s4 1983009808
      %v2267 = vunpack.c.0.s8 %v2266
      %v2268 = vlaneseq
      %v2269 = vshrl.u32 %v2268, 7
      %v2270 = vsub.s32 %v2267, %v2269
      %v2271 = vrot.slane %v2125, %v2270
      %v2273 = vunpack.c.l.s4 1983009808
      %v2274 = vunpack.c.0.s8 %v2273
      %v2275 = vlaneseq
      %v2276 = vshrl.u32 %v2275, 7
      %v2277 = vsub.s32 %v2274, %v2276
      %v2278 = vrot.slane %v2264, %v2277
      %v2279 = vcombine.high %v2271, %v2271
      %v2280 = vcombine.high %v2278, %v2278
      %v2282 = vunpack.c.l.s4 1983009808
      %v2283 = vunpack.c.0.s8 %v2282
      %v2284 = vlaneseq
      %v2285 = vshrl.u32 %v2284, 7
      %v2286 = vsub.s32 %v2283, %v2285
      %v2287 = vrot.slane %v2126, %v2286
      %v2288 = vcombine.high %v2287, %v2287
      %vm2325 = vcmask 58368
      %v2326 = vsel %vm2325, %v2146, -inf
      %v2327 = vrot.slane %v2326, 4
      %v2328 = vmax.f32 %v2326, %v2327
      %v2329 = vrot.slane %v2328, 2
      %v2330 = vmax.f32 %v2328, %v2329
      %v2331 = vrot.slane %v2330, 1
      %v2332 = vmax.f32 %v2330, %v2331
      %v2333 = vsel %vm2325, %v2154, -inf
      %v2334 = vrot.slane %v2333, 4
      %v2335 = vmax.f32 %v2333, %v2334
      %v2336 = vrot.slane %v2335, 2
      %v2337 = vmax.f32 %v2335, %v2336
      %v2338 = vrot.slane %v2337, 1
      %v2339 = vmax.f32 %v2337, %v2338
      %v2340 = vsel %vm2325, %v2153, -inf
      %v2341 = vrot.slane %v2340, 4
      %v2342 = vmax.f32 %v2340, %v2341
      %v2343 = vrot.slane %v2342, 2
      %v2344 = vmax.f32 %v2342, %v2343
      %v2345 = vrot.slane %v2344, 1
      %v2346 = vmax.f32 %v2344, %v2345
      %v2347 = vsel %vm2325, %v2155, -inf
      %v2348 = vrot.slane %v2347, 4
      %v2349 = vmax.f32 %v2347, %v2348
      %v2350 = vrot.slane %v2349, 2
      %v2351 = vmax.f32 %v2349, %v2350
      %v2352 = vrot.slane %v2351, 1
      %v2353 = vmax.f32 %v2351, %v2352
      %v2354 = vsel %vm2325, %v2162, -inf
      %v2355 = vrot.slane %v2354, 4
      %v2356 = vmax.f32 %v2354, %v2355
      %v2357 = vrot.slane %v2356, 2
      %v2358 = vmax.f32 %v2356, %v2357
      %v2359 = vrot.slane %v2358, 1
      %v2360 = vmax.f32 %v2358, %v2359
      %v2361 = vsel %vm2325, %v2163, -inf
      %v2362 = vrot.slane %v2361, 4
      %v2363 = vmax.f32 %v2361, %v2362
      %v2364 = vrot.slane %v2363, 2
      %v2365 = vmax.f32 %v2363, %v2364
      %v2366 = vrot.slane %v2365, 1
      %v2367 = vmax.f32 %v2365, %v2366
      %v2368 = vsel %vm2325, %v2171, -inf
      %v2369 = vrot.slane %v2368, 4
      %v2370 = vmax.f32 %v2368, %v2369
      %v2371 = vrot.slane %v2370, 2
      %v2372 = vmax.f32 %v2370, %v2371
      %v2373 = vrot.slane %v2372, 1
      %v2374 = vmax.f32 %v2372, %v2373
      %v2375 = vsel %vm2325, %v2179, -inf
      %v2376 = vrot.slane %v2375, 4
      %v2377 = vmax.f32 %v2375, %v2376
      %v2378 = vrot.slane %v2377, 2
      %v2379 = vmax.f32 %v2377, %v2378
      %v2380 = vrot.slane %v2379, 1
      %v2381 = vmax.f32 %v2379, %v2380
      %v2382 = vsel %vm2325, %v2178, -inf
      %v2383 = vrot.slane %v2382, 4
      %v2384 = vmax.f32 %v2382, %v2383
      %v2385 = vrot.slane %v2384, 2
      %v2386 = vmax.f32 %v2384, %v2385
      %v2387 = vrot.slane %v2386, 1
      %v2388 = vmax.f32 %v2386, %v2387
      %v2389 = vsel %vm2325, %v2180, -inf
      %v2390 = vrot.slane %v2389, 4
      %v2391 = vmax.f32 %v2389, %v2390
      %v2392 = vrot.slane %v2391, 2
      %v2393 = vmax.f32 %v2391, %v2392
      %v2394 = vrot.slane %v2393, 1
      %v2395 = vmax.f32 %v2393, %v2394
      %v2396 = vsel %vm2325, %v2187, -inf
      %v2397 = vrot.slane %v2396, 4
      %v2398 = vmax.f32 %v2396, %v2397
      %v2399 = vrot.slane %v2398, 2
      %v2400 = vmax.f32 %v2398, %v2399
      %v2401 = vrot.slane %v2400, 1
      %v2402 = vmax.f32 %v2400, %v2401
      %v2403 = vsel %vm2325, %v2188, -inf
      %v2404 = vrot.slane %v2403, 4
      %v2405 = vmax.f32 %v2403, %v2404
      %v2406 = vrot.slane %v2405, 2
      %v2407 = vmax.f32 %v2405, %v2406
      %v2408 = vrot.slane %v2407, 1
      %v2409 = vmax.f32 %v2407, %v2408
      %v2410 = vsel %vm2325, %v2196, -inf
      %v2411 = vrot.slane %v2410, 4
      %v2412 = vmax.f32 %v2410, %v2411
      %v2413 = vrot.slane %v2412, 2
      %v2414 = vmax.f32 %v2412, %v2413
      %v2415 = vrot.slane %v2414, 1
      %v2416 = vmax.f32 %v2414, %v2415
      %v2417 = vsel %vm2325, %v2204, -inf
      %v2418 = vrot.slane %v2417, 4
      %v2419 = vmax.f32 %v2417, %v2418
      %v2420 = vrot.slane %v2419, 2
      %v2421 = vmax.f32 %v2419, %v2420
      %v2422 = vrot.slane %v2421, 1
      %v2423 = vmax.f32 %v2421, %v2422
      %v2424 = vsel %vm2325, %v2203, -inf
      %v2425 = vrot.slane %v2424, 4
      %v2426 = vmax.f32 %v2424, %v2425
      %v2427 = vrot.slane %v2426, 2
      %v2428 = vmax.f32 %v2426, %v2427
      %v2429 = vrot.slane %v2428, 1
      %v2430 = vmax.f32 %v2428, %v2429
      %v2431 = vsel %vm2325, %v2205, -inf
      %v2432 = vrot.slane %v2431, 4
      %v2433 = vmax.f32 %v2431, %v2432
      %v2434 = vrot.slane %v2433, 2
      %v2435 = vmax.f32 %v2433, %v2434
      %v2436 = vrot.slane %v2435, 1
      %v2437 = vmax.f32 %v2435, %v2436
      %v2438 = vsel %vm2325, %v2212, -inf
      %v2439 = vrot.slane %v2438, 4
      %v2440 = vmax.f32 %v2438, %v2439
      %v2441 = vrot.slane %v2440, 2
      %v2442 = vmax.f32 %v2440, %v2441
      %v2443 = vrot.slane %v2442, 1
      %v2444 = vmax.f32 %v2442, %v2443
      %v2445 = vsel %vm2325, %v2213, -inf
      %v2446 = vrot.slane %v2445, 4
      %v2447 = vmax.f32 %v2445, %v2446
      %v2448 = vrot.slane %v2447, 2
      %v2449 = vmax.f32 %v2447, %v2448
      %v2450 = vrot.slane %v2449, 1
      %v2451 = vmax.f32 %v2449, %v2450
      %v2452 = vsel %vm2325, %v2221, -inf
      %v2453 = vrot.slane %v2452, 4
      %v2454 = vmax.f32 %v2452, %v2453
      %v2455 = vrot.slane %v2454, 2
      %v2456 = vmax.f32 %v2454, %v2455
      %v2457 = vrot.slane %v2456, 1
      %v2458 = vmax.f32 %v2456, %v2457
      %v2459 = vsel %vm2325, %v2229, -inf
      %v2460 = vrot.slane %v2459, 4
      %v2461 = vmax.f32 %v2459, %v2460
      %v2462 = vrot.slane %v2461, 2
      %v2463 = vmax.f32 %v2461, %v2462
      %v2464 = vrot.slane %v2463, 1
      %v2465 = vmax.f32 %v2463, %v2464
      %v2466 = vsel %vm2325, %v2228, -inf
      %v2467 = vrot.slane %v2466, 4
      %v2468 = vmax.f32 %v2466, %v2467
      %v2469 = vrot.slane %v2468, 2
      %v2470 = vmax.f32 %v2468, %v2469
      %v2471 = vrot.slane %v2470, 1
      %v2472 = vmax.f32 %v2470, %v2471
      %v2473 = vsel %vm2325, %v2230, -inf
      %v2474 = vrot.slane %v2473, 4
      %v2475 = vmax.f32 %v2473, %v2474
      %v2476 = vrot.slane %v2475, 2
      %v2477 = vmax.f32 %v2475, %v2476
      %v2478 = vrot.slane %v2477, 1
      %v2479 = vmax.f32 %v2477, %v2478
      %v2480 = vsel %vm2325, %v2237, -inf
      %v2481 = vrot.slane %v2480, 4
      %v2482 = vmax.f32 %v2480, %v2481
      %v2483 = vrot.slane %v2482, 2
      %v2484 = vmax.f32 %v2482, %v2483
      %v2485 = vrot.slane %v2484, 1
      %v2486 = vmax.f32 %v2484, %v2485
      %v2487 = vsel %vm2325, %v2238, -inf
      %v2488 = vrot.slane %v2487, 4
      %v2489 = vmax.f32 %v2487, %v2488
      %v2490 = vrot.slane %v2489, 2
      %v2491 = vmax.f32 %v2489, %v2490
      %v2492 = vrot.slane %v2491, 1
      %v2493 = vmax.f32 %v2491, %v2492
      %v2494 = vsel %vm2325, %v2246, -inf
      %v2495 = vrot.slane %v2494, 4
      %v2496 = vmax.f32 %v2494, %v2495
      %v2497 = vrot.slane %v2496, 2
      %v2498 = vmax.f32 %v2496, %v2497
      %v2499 = vrot.slane %v2498, 1
      %v2500 = vmax.f32 %v2498, %v2499
      %v2501 = vsel %vm2325, %v2254, -inf
      %v2502 = vrot.slane %v2501, 4
      %v2503 = vmax.f32 %v2501, %v2502
      %v2504 = vrot.slane %v2503, 2
      %v2505 = vmax.f32 %v2503, %v2504
      %v2506 = vrot.slane %v2505, 1
      %v2507 = vmax.f32 %v2505, %v2506
      %v2508 = vsel %vm2325, %v2253, -inf
      %v2509 = vrot.slane %v2508, 4
      %v2510 = vmax.f32 %v2508, %v2509
      %v2511 = vrot.slane %v2510, 2
      %v2512 = vmax.f32 %v2510, %v2511
      %v2513 = vrot.slane %v2512, 1
      %v2514 = vmax.f32 %v2512, %v2513
      %v2515 = vsel %vm2325, %v2255, -inf
      %v2516 = vrot.slane %v2515, 4
      %v2517 = vmax.f32 %v2515, %v2516
      %v2518 = vrot.slane %v2517, 2
      %v2519 = vmax.f32 %v2517, %v2518
      %v2520 = vrot.slane %v2519, 1
      %v2521 = vmax.f32 %v2519, %v2520
      %v2522 = vsel %vm2325, %v2262, -inf
      %v2523 = vrot.slane %v2522, 4
      %v2524 = vmax.f32 %v2522, %v2523
      %v2525 = vrot.slane %v2524, 2
      %v2526 = vmax.f32 %v2524, %v2525
      %v2527 = vrot.slane %v2526, 1
      %v2528 = vmax.f32 %v2526, %v2527
      %v2529 = vsel %vm2325, %v2263, -inf
      %v2530 = vrot.slane %v2529, 4
      %v2531 = vmax.f32 %v2529, %v2530
      %v2532 = vrot.slane %v2531, 2
      %v2533 = vmax.f32 %v2531, %v2532
      %v2534 = vrot.slane %v2533, 1
      %v2535 = vmax.f32 %v2533, %v2534
      %v2536 = vsel %vm2325, %v2271, -inf
      %v2537 = vrot.slane %v2536, 4
      %v2538 = vmax.f32 %v2536, %v2537
      %v2539 = vrot.slane %v2538, 2
      %v2540 = vmax.f32 %v2538, %v2539
      %v2541 = vrot.slane %v2540, 1
      %v2542 = vmax.f32 %v2540, %v2541
      %v2543 = vsel %vm2325, %v2279, -inf
      %v2544 = vrot.slane %v2543, 4
      %v2545 = vmax.f32 %v2543, %v2544
      %v2546 = vrot.slane %v2545, 2
      %v2547 = vmax.f32 %v2545, %v2546
      %v2548 = vrot.slane %v2547, 1
      %v2549 = vmax.f32 %v2547, %v2548
      %v2550 = vsel %vm2325, %v2278, -inf
      %v2551 = vrot.slane %v2550, 4
      %v2552 = vmax.f32 %v2550, %v2551
      %v2553 = vrot.slane %v2552, 2
      %v2554 = vmax.f32 %v2552, %v2553
      %v2555 = vrot.slane %v2554, 1
      %v2556 = vmax.f32 %v2554, %v2555
      %v2557 = vsel %vm2325, %v2280, -inf
      %v2558 = vrot.slane %v2557, 4
      %v2559 = vmax.f32 %v2557, %v2558
      %v2560 = vrot.slane %v2559, 2
      %v2561 = vmax.f32 %v2559, %v2560
      %v2562 = vrot.slane %v2561, 1
      %v2563 = vmax.f32 %v2561, %v2562
      %v2564 = vsel %vm2325, %v2287, -inf
      %v2565 = vrot.slane %v2564, 4
      %v2566 = vmax.f32 %v2564, %v2565
      %v2567 = vrot.slane %v2566, 2
      %v2568 = vmax.f32 %v2566, %v2567
      %v2569 = vrot.slane %v2568, 1
      %v2570 = vmax.f32 %v2568, %v2569
      %v2571 = vsel %vm2325, %v2288, -inf
      %v2572 = vrot.slane %v2571, 4
      %v2573 = vmax.f32 %v2571, %v2572
      %v2574 = vrot.slane %v2573, 2
      %v2575 = vmax.f32 %v2573, %v2574
      %v2576 = vrot.slane %v2575, 1
      %v2577 = vmax.f32 %v2575, %v2576
      %vm2614 = vcmask 1041409
      %v2615 = vsel %vm2614, %v2339, %v2332
      %vm2616 = vcmask 1042434
      %v2617 = vsel %vm2616, %v2346, %v2615
      %vm2618 = vcmask 1043459
      %v2619 = vsel %vm2618, %v2353, %v2617
      %vm2620 = vcmask 1044484
      %v2621 = vsel %vm2620, %v2360, %v2619
      %vm2622 = vcmask 1045509
      %v2623 = vsel %vm2622, %v2367, %v2621
      %v2624 = vsel %vm2614, %v2381, %v2374
      %v2625 = vsel %vm2616, %v2388, %v2624
      %v2626 = vsel %vm2618, %v2395, %v2625
      %v2627 = vsel %vm2620, %v2402, %v2626
      %v2628 = vsel %vm2622, %v2409, %v2627
      %v2629 = vsel %vm2614, %v2423, %v2416
      %v2630 = vsel %vm2616, %v2430, %v2629
      %v2631 = vsel %vm2618, %v2437, %v2630
      %v2632 = vsel %vm2620, %v2444, %v2631
      %v2633 = vsel %vm2622, %v2451, %v2632
      %v2634 = vsel %vm2614, %v2465, %v2458
      %v2635 = vsel %vm2616, %v2472, %v2634
      %v2636 = vsel %vm2618, %v2479, %v2635
      %v2637 = vsel %vm2620, %v2486, %v2636
      %v2638 = vsel %vm2622, %v2493, %v2637
      %v2639 = vsel %vm2614, %v2507, %v2500
      %v2640 = vsel %vm2616, %v2514, %v2639
      %v2641 = vsel %vm2618, %v2521, %v2640
      %v2642 = vsel %vm2620, %v2528, %v2641
      %v2643 = vsel %vm2622, %v2535, %v2642
      %v2644 = vsel %vm2614, %v2549, %v2542
      %v2645 = vsel %vm2616, %v2556, %v2644
      %v2646 = vsel %vm2618, %v2563, %v2645
      %v2647 = vsel %vm2620, %v2570, %v2646
      %v2648 = vsel %vm2622, %v2577, %v2647
      %vm2655 = vcmask 62464
      %2656 = vst.msk [vmem:[%s224] sm:$0x3f] %vm2655, %v2623
      %2657 = vst.msk [vmem:[%s224 + $0x8] sm:$0x3f] %vm2655, %v2628
      %2658 = vst.msk [vmem:[%s224 + $0x10] sm:$0x3f] %vm2655, %v2633
      %2659 = vst.msk [vmem:[%s224 + $0x18] sm:$0x3f] %vm2655, %v2638
      %2660 = vst.msk [vmem:[%s224 + $0x20] sm:$0x3f] %vm2655, %v2643
      %2661 = vst.msk [vmem:[%s224 + $0x28] sm:$0x3f] %vm2655, %v2648
      %p2662 = scmp.lt.s32.totalorder %s16, 1
      %s2663 = scalar_select %p2662, %s16, 1
      %s2664 = smul.addr %s2663, 6
      %s2665 = smul.addr %s2664, 8
      %s2666 = scalar_lea.vmem %s5, %s2665
      // Predicated region
      $region41: #{tpu_custom_call.1} parent=39 // pred_check
        %p2667 = pneg %p144
      $region42: #{tpu_custom_call.1} parent=39 // pred_check_branch
        %2669 = sbr.rel (%p2667) target = $region44
      $region43: #{tpu_custom_call.1} parent=39 // pred_region
        _
      $region44: #{tpu_custom_call.1} parent=39 // pred_fallthru
        _
    $region40: #{tpu_custom_call.1} parent=5 // pred_fallthru
      _
    %p2670 = scmp.le.s32.totalorder 2, %s11
    // Predicated region
    $region45: #{tpu_custom_call.1} parent=5 // pred_check
      %p2671 = pneg %p2670
    $region46: #{tpu_custom_call.1} parent=5 // pred_check_branch
      %2673 = sbr.rel (%p2671) target = $region48
    $region47: #{tpu_custom_call.1} parent=5 // pred_region
      %s2674 = ssub.s32 %s11, 2
      // Predicated region
      $region49: #{tpu_custom_call.1} parent=47 // pred_check
        %p2675 = pneg %p150
      $region50: #{tpu_custom_call.1} parent=47 // pred_check_branch
        %2677 = sbr.rel (%p2675) target = $region52
      $region51: #{tpu_custom_call.1} parent=47 // pred_region
        %p2678 = scmp.lt.s32.totalorder %s17, 1
        %s2679 = scalar_select %p2678, %s17, 1
        %s2680 = smul.addr %s2679, 6
        %s2681 = smul.addr %s2680, 8
        %s2682 = scalar_lea.vmem %s5, %s2681
      $region52: #{tpu_custom_call.1} parent=47 // pred_fallthru
        _
    $region48: #{tpu_custom_call.1} parent=5 // pred_fallthru
      _
  $region6: #{tpu_custom_call.1} parent=0 // loop_footer
    %s15 = sadd.s32 1, %s11
  $region7: #{tpu_custom_call.1} parent=0 // loop_footer_branch
    %10 = sbr.rel target = $region3
  $region8: #{tpu_custom_call.1} parent=0 // loop_exit
    _

</llo_original>
